<compile_context>
chip_gen: v5e
topology: v5e:2x2
jax: 0.10.0
libtpu: 0.0.40
codegen_flags: <defaults>
</compile_context>

<pallas_src>
import functools

import jax
import jax.numpy as jnp
from jax.experimental import pallas as pl
from jax.experimental.pallas import tpu as pltpu

_LANE = 128     # TPU lane width (last-dim tile)
_SUBLANE = 8    # TPU sublane width (second-to-last-dim tile)


def _round_up(x, m):
    return (x + m - 1) // m * m


def _wae_disc_kernel(x_ref,
                     w1_ref, b1_ref,
                     w2_ref, b2_ref,
                     w3_ref, b3_ref,
                     w4_ref, b4_ref,
                     w5_ref, b5_ref,
                     o_ref):
    """One batch tile of the 5-layer MLP, fully fused in VMEM (f32 MXU accumulation)."""

    def layer(h, w_ref, b_ref, *, relu):
        # Cast LHS to the weight dtype: no-op for f32 weights, native bf16 MXU path
        # for bf16 weights.  Accumulate + bias + ReLU in f32 (safe on v5e too).
        acc = jnp.dot(h.astype(w_ref.dtype), w_ref[...],
                      preferred_element_type=jnp.float32)
        acc = acc + b_ref[...].astype(jnp.float32)
        return jnp.maximum(acc, 0.0) if relu else acc

    h = layer(x_ref[...], w1_ref, b1_ref, relu=True)
    h = layer(h, w2_ref, b2_ref, relu=True)
    h = layer(h, w3_ref, b3_ref, relu=True)
    h = layer(h, w4_ref, b4_ref, relu=True)
    # Final layer padded to `out_lanes` columns (real logit lives in column 0).
    out = layer(h, w5_ref, b5_ref, relu=False)
    o_ref[...] = out.astype(o_ref.dtype)


def wae_discriminator_forward(x, params, *, block_b=None, weight_dtype=jnp.bfloat16,
                              out_pad_lanes=None, vmem_limit_bytes=None):
    """x: (B, z_size). params: list of (W, b) with W (in, out), b (1, out). Returns (B, 1).

    weight_dtype: storage/MXU dtype for the weight matrices (default bf16; pass None
    to keep the original f32 weights).  Accumulation is always f32.
    """
    B, n_z = x.shape
    (w1, b1), (w2, b2), (w3, b3), (w4, b4), (w5, b5) = params
    dim_h = w1.shape[1]

    # bf16 (or caller-chosen) weight storage: halves weight DMA, enables native MXU path.
    if weight_dtype is not None:
        w1, w2, w3, w4, w5 = (w.astype(weight_dtype) for w in (w1, w2, w3, w4, w5))

    # Output lane padding for the (dim_h, 1) head:
    #   * 128 lanes -> unmasked lane-dense output stores (best for small/medium B).
    #   * 8 lanes for large B -> 16x less padded output writeback (masked vst is fine
    #     once the batch is big enough that writeback would rival the weight traffic).
    if out_pad_lanes is None:
        out_pad_lanes = _LANE if B <= 4096 else _SUBLANE
    out_lanes = max(int(out_pad_lanes), w5.shape[1])
    if w5.shape[1] != out_lanes:
        w5 = jnp.pad(w5, ((0, 0), (0, out_lanes - w5.shape[1])))
        b5 = jnp.pad(b5, ((0, 0), (0, out_lanes - b5.shape[1])))

    # Batch tiling: 256 is MXU-friendly everywhere; 512 for large batches amortizes
    # per-step overhead and fills the 2x256x256 MXU on v6e/v7x.  Clamp for tiny B and
    # keep the tile a multiple of the 8-row sublane; pad the batch so any B works.
    if block_b is None:
        block_b = 512 if B >= 2048 else 256
    block_b = _round_up(max(_SUBLANE, min(block_b, _round_up(B, _SUBLANE))), _SUBLANE)
    if block_b > 256 and vmem_limit_bytes is None:
        vmem_limit_bytes = 32 << 20   # larger tiles: raise scoped VMEM explicitly
    B_pad = _round_up(B, block_b)
    if B_pad != B:
        x = jnp.pad(x, ((0, B_pad - B), (0, 0)))
    grid = (B_pad // block_b,)

    # Weights/biases: whole array, constant block index -> fetched once, VMEM-resident
    # for the entire grid; Buffered(1) stops the pipeliner double-buffering them.
    def resident_spec(arr):
        return pl.BlockSpec(arr.shape, lambda i: (0, 0), pipeline_mode=pl.Buffered(1))

    in_specs = [
        pl.BlockSpec((block_b, n_z), lambda i: (i, 0)),
        resident_spec(w1), resident_spec(b1),
        resident_spec(w2), resident_spec(b2),
        resident_spec(w3), resident_spec(b3),
        resident_spec(w4), resident_spec(b4),
        resident_spec(w5), resident_spec(b5),
    ]
    out_spec = pl.BlockSpec((block_b, out_lanes), lambda i: (i, 0))

    # Advisory cost estimate so XLA schedules this small kernel sensibly.
    x_itemsize = jnp.dtype(x.dtype).itemsize
    flops = 2 * B_pad * (n_z * dim_h + 3 * dim_h * dim_h + dim_h * out_lanes)
    weight_bytes = sum(int(w.size) * jnp.dtype(w.dtype).itemsize
                       + int(b.size) * jnp.dtype(b.dtype).itemsize
                       for (w, b) in ((w1, b1), (w2, b2), (w3, b3), (w4, b4), (w5, b5)))
    bytes_accessed = int(x.size) * x_itemsize + weight_bytes + B_pad * out_lanes * x_itemsize
    cost = pl.CostEstimate(flops=flops, transcendentals=0, bytes_accessed=bytes_accessed)

    compiler_params = pltpu.CompilerParams(
        dimension_semantics=("parallel",),   # >=2 batch tiles -> both v7x TCs used
        vmem_limit_bytes=vmem_limit_bytes,
    )

    out = pl.pallas_call(
        _wae_disc_kernel,
        out_shape=jax.ShapeDtypeStruct((B_pad, out_lanes), x.dtype),
        grid_spec=pltpu.PrefetchScalarGridSpec(
            num_scalar_prefetch=0,
            grid=grid,
            in_specs=in_specs,
            out_specs=out_spec,
        ),
        compiler_params=compiler_params,
        cost_estimate=cost,
    )(x, w1, b1, w2, b2, w3, b3, w4, b4, w5, b5)

    # Column 0 carries the real logit; drop the batch padding.
    return out[:B, :1]


def init_wae_discriminator_params(key, z_size=128, dim_h=512, dtype=jnp.float32):
    """Match the PyTorch init: weight ~ N(0, 0.0099999), bias = 0.  PyTorch weights are
    (out, in); we store the transpose (in, out) so the kernel computes x @ W + b."""
    dims = [(z_size, dim_h), (dim_h, dim_h), (dim_h, dim_h), (dim_h, dim_h), (dim_h, 1)]
    params = []
    for (fan_in, fan_out) in dims:
        key, wk = jax.random.split(key)
        w_pt = 0.0099999 * jax.random.normal(wk, (fan_out, fan_in), dtype=dtype)
        params.append((jnp.transpose(w_pt), jnp.zeros((1, fan_out), dtype=dtype)))
    return params


def _reference_forward(x, params, weight_dtype=None):
    """Pure-JAX reference.  weight_dtype emulates the kernel's storage-dtype rounding
    of weights and matmul LHS (f32 accumulation), so comparisons stay tight."""
    h = x.astype(jnp.float32)
    for i, (w, b) in enumerate(params):
        if weight_dtype is not None:
            w = w.astype(weight_dtype).astype(jnp.float32)
            h = h.astype(weight_dtype).astype(jnp.float32)
        h = h @ w + b.astype(jnp.float32)
        if i < len(params) - 1:
            h = jnp.maximum(h, 0.0)
    return h


if __name__ == "__main__":
    key = jax.random.PRNGKey(0)
    z_size, dim_h = 128, 512

    pkey, xkey = jax.random.split(key)
    params = init_wae_discriminator_params(pkey, z_size=z_size, dim_h=dim_h)

    # Default path: bf16 weights, f32 accumulation.
    fwd_bf16 = jax.jit(functools.partial(wae_discriminator_forward))
    # f32-weight path (bit-tight vs the plain f32 reference).
    fwd_f32 = jax.jit(functools.partial(wae_discriminator_forward, weight_dtype=None))
    # 8-lane output-padding path (the large-batch writeback layout), forced here so it
    # is exercised at a small shape.
    fwd_8lane = jax.jit(functools.partial(wae_discriminator_forward, out_pad_lanes=8))

    # 1) Small batch, single tile (tile clamps to 16), bf16 weights.
    batch = 16
    x = jax.random.normal(xkey, (batch, z_size), dtype=jnp.float32)
    out = jax.block_until_ready(fwd_bf16(x, params))
    ref = _reference_forward(x, params, weight_dtype=jnp.bfloat16)
    assert out.shape == (batch, 1), out.shape
    assert jnp.allclose(out, ref, atol=1e-6, rtol=5e-3), "mismatch (bf16 weights)"

    # 2) f32 weights, bit-tight against the pure-f32 reference.
    out_f32 = jax.block_until_ready(fwd_f32(x, params))
    ref_f32 = _reference_forward(x, params)
    assert out_f32.shape == (batch, 1), out_f32.shape
    assert jnp.allclose(out_f32, ref_f32, atol=1e-5, rtol=1e-5), "mismatch (f32 weights)"

    # 3) Batch not a multiple of the tile -> padding + multi-tile grid (bf16 weights).
    batch2 = 384
    x2 = jax.random.normal(jax.random.PRNGKey(1), (batch2, z_size), dtype=jnp.float32)
    out2 = jax.block_until_ready(fwd_bf16(x2, params))
    ref2 = _reference_forward(x2, params, weight_dtype=jnp.bfloat16)
    assert out2.shape == (batch2, 1), out2.shape
    assert jnp.allclose(out2, ref2, atol=1e-6, rtol=5e-3), "mismatch (padded batch)"

    # 4) 8-lane output padding path (masked vst head layout used for very large B).
    batch3 = 40
    x3 = jax.random.normal(jax.random.PRNGKey(2), (batch3, z_size), dtype=jnp.float32)
    out3 = jax.block_until_ready(fwd_8lane(x3, params))
    ref3 = _reference_forward(x3, params, weight_dtype=jnp.bfloat16)
    assert out3.shape == (batch3, 1), out3.shape
    assert jnp.allclose(out3, ref3, atol=1e-6, rtol=5e-3), "mismatch (8-lane head)"

    print("KERNEL_OK")
</pallas_src>

<mosaic_0001>
module attributes {stable_mosaic.version = 11 : i64} {
  func.func @_wae_disc_kernel(%arg0: i32, %arg1: memref<16x128xf32, #tpu.memory_space<vmem>>, %arg2: memref<128x512xbf16, #tpu.memory_space<vmem>>, %arg3: memref<1x512xf32, #tpu.memory_space<vmem>>, %arg4: memref<512x512xbf16, #tpu.memory_space<vmem>>, %arg5: memref<1x512xf32, #tpu.memory_space<vmem>>, %arg6: memref<512x512xbf16, #tpu.memory_space<vmem>>, %arg7: memref<1x512xf32, #tpu.memory_space<vmem>>, %arg8: memref<512x512xbf16, #tpu.memory_space<vmem>>, %arg9: memref<1x512xf32, #tpu.memory_space<vmem>>, %arg10: memref<512x128xbf16, #tpu.memory_space<vmem>>, %arg11: memref<1x128xf32, #tpu.memory_space<vmem>>, %arg12: memref<16x128xf32, #tpu.memory_space<vmem>>) attributes {dimension_semantics = [#tpu.dimension_semantics<parallel>], iteration_bounds = array<i64: 1>, scalar_prefetch = 0 : i64, scratch_operands = 0 : i64, tpu.core_type = #tpu.core_type<tc>, window_params = [{transform_indices = @transform_0, window_bounds = array<i64: 16, 128>}, {pipeline_mode = #tpu.pipeline_mode<synchronous>, transform_indices = @transform_1, window_bounds = array<i64: 128, 512>}, {pipeline_mode = #tpu.pipeline_mode<synchronous>, transform_indices = @transform_2, window_bounds = array<i64: 1, 512>}, {pipeline_mode = #tpu.pipeline_mode<synchronous>, transform_indices = @transform_3, window_bounds = array<i64: 512, 512>}, {pipeline_mode = #tpu.pipeline_mode<synchronous>, transform_indices = @transform_4, window_bounds = array<i64: 1, 512>}, {pipeline_mode = #tpu.pipeline_mode<synchronous>, transform_indices = @transform_5, window_bounds = array<i64: 512, 512>}, {pipeline_mode = #tpu.pipeline_mode<synchronous>, transform_indices = @transform_6, window_bounds = array<i64: 1, 512>}, {pipeline_mode = #tpu.pipeline_mode<synchronous>, transform_indices = @transform_7, window_bounds = array<i64: 512, 512>}, {pipeline_mode = #tpu.pipeline_mode<synchronous>, transform_indices = @transform_8, window_bounds = array<i64: 1, 512>}, {pipeline_mode = #tpu.pipeline_mode<synchronous>, transform_indices = @transform_9, window_bounds = array<i64: 512, 128>}, {pipeline_mode = #tpu.pipeline_mode<synchronous>, transform_indices = @transform_10, window_bounds = array<i64: 1, 128>}, {transform_indices = @transform_11, window_bounds = array<i64: 16, 128>}]} {
    %c0 = arith.constant 0 : index
    %c0_0 = arith.constant 0 : index
    %0 = vector.load %arg1[%c0, %c0_0] : memref<16x128xf32, #tpu.memory_space<vmem>>, vector<16x128xf32>
    %1 = arith.truncf %0 : vector<16x128xf32> to vector<16x128xbf16>
    %c0_1 = arith.constant 0 : index
    %c0_2 = arith.constant 0 : index
    %2 = vector.load %arg2[%c0_1, %c0_2] : memref<128x512xbf16, #tpu.memory_space<vmem>>, vector<128x512xbf16>
    %cst = arith.constant dense<0.000000e+00> : vector<16x512xf32>
    %3 = tpu.matmul %1, %2, %cst {dimension_numbers = #tpu.dot_dimension_numbers<[1], [0], [0], [1], [0, 0, 1, 1], [], []>} : vector<16x128xbf16>, vector<128x512xbf16>, vector<16x512xf32> -> vector<16x512xf32>
    %c0_3 = arith.constant 0 : index
    %c0_4 = arith.constant 0 : index
    %4 = vector.load %arg3[%c0_3, %c0_4] : memref<1x512xf32, #tpu.memory_space<vmem>>, vector<1x512xf32>
    %5 = vector.broadcast %4 : vector<1x512xf32> to vector<16x512xf32>
    %6 = arith.addf %3, %5 : vector<16x512xf32>
    %cst_5 = arith.constant 0.000000e+00 : f32
    %7 = vector.broadcast %cst_5 : f32 to vector<16x512xf32>
    %8 = arith.maximumf %6, %7 : vector<16x512xf32>
    %9 = arith.truncf %8 : vector<16x512xf32> to vector<16x512xbf16>
    %c0_6 = arith.constant 0 : index
    %c0_7 = arith.constant 0 : index
    %10 = vector.load %arg4[%c0_6, %c0_7] : memref<512x512xbf16, #tpu.memory_space<vmem>>, vector<512x512xbf16>
    %cst_8 = arith.constant dense<0.000000e+00> : vector<16x512xf32>
    %11 = tpu.matmul %9, %10, %cst_8 {dimension_numbers = #tpu.dot_dimension_numbers<[1], [0], [0], [1], [0, 0, 1, 1], [], []>} : vector<16x512xbf16>, vector<512x512xbf16>, vector<16x512xf32> -> vector<16x512xf32>
    %c0_9 = arith.constant 0 : index
    %c0_10 = arith.constant 0 : index
    %12 = vector.load %arg5[%c0_9, %c0_10] : memref<1x512xf32, #tpu.memory_space<vmem>>, vector<1x512xf32>
    %13 = vector.broadcast %12 : vector<1x512xf32> to vector<16x512xf32>
    %14 = arith.addf %11, %13 : vector<16x512xf32>
    %cst_11 = arith.constant 0.000000e+00 : f32
    %15 = vector.broadcast %cst_11 : f32 to vector<16x512xf32>
    %16 = arith.maximumf %14, %15 : vector<16x512xf32>
    %17 = arith.truncf %16 : vector<16x512xf32> to vector<16x512xbf16>
    %c0_12 = arith.constant 0 : index
    %c0_13 = arith.constant 0 : index
    %18 = vector.load %arg6[%c0_12, %c0_13] : memref<512x512xbf16, #tpu.memory_space<vmem>>, vector<512x512xbf16>
    %cst_14 = arith.constant dense<0.000000e+00> : vector<16x512xf32>
    %19 = tpu.matmul %17, %18, %cst_14 {dimension_numbers = #tpu.dot_dimension_numbers<[1], [0], [0], [1], [0, 0, 1, 1], [], []>} : vector<16x512xbf16>, vector<512x512xbf16>, vector<16x512xf32> -> vector<16x512xf32>
    %c0_15 = arith.constant 0 : index
    %c0_16 = arith.constant 0 : index
    %20 = vector.load %arg7[%c0_15, %c0_16] : memref<1x512xf32, #tpu.memory_space<vmem>>, vector<1x512xf32>
    %21 = vector.broadcast %20 : vector<1x512xf32> to vector<16x512xf32>
    %22 = arith.addf %19, %21 : vector<16x512xf32>
    %cst_17 = arith.constant 0.000000e+00 : f32
    %23 = vector.broadcast %cst_17 : f32 to vector<16x512xf32>
    %24 = arith.maximumf %22, %23 : vector<16x512xf32>
    %25 = arith.truncf %24 : vector<16x512xf32> to vector<16x512xbf16>
    %c0_18 = arith.constant 0 : index
    %c0_19 = arith.constant 0 : index
    %26 = vector.load %arg8[%c0_18, %c0_19] : memref<512x512xbf16, #tpu.memory_space<vmem>>, vector<512x512xbf16>
    %cst_20 = arith.constant dense<0.000000e+00> : vector<16x512xf32>
    %27 = tpu.matmul %25, %26, %cst_20 {dimension_numbers = #tpu.dot_dimension_numbers<[1], [0], [0], [1], [0, 0, 1, 1], [], []>} : vector<16x512xbf16>, vector<512x512xbf16>, vector<16x512xf32> -> vector<16x512xf32>
    %c0_21 = arith.constant 0 : index
    %c0_22 = arith.constant 0 : index
    %28 = vector.load %arg9[%c0_21, %c0_22] : memref<1x512xf32, #tpu.memory_space<vmem>>, vector<1x512xf32>
    %29 = vector.broadcast %28 : vector<1x512xf32> to vector<16x512xf32>
    %30 = arith.addf %27, %29 : vector<16x512xf32>
    %cst_23 = arith.constant 0.000000e+00 : f32
    %31 = vector.broadcast %cst_23 : f32 to vector<16x512xf32>
    %32 = arith.maximumf %30, %31 : vector<16x512xf32>
    %33 = arith.truncf %32 : vector<16x512xf32> to vector<16x512xbf16>
    %c0_24 = arith.constant 0 : index
    %c0_25 = arith.constant 0 : index
    %34 = vector.load %arg10[%c0_24, %c0_25] : memref<512x128xbf16, #tpu.memory_space<vmem>>, vector<512x128xbf16>
    %cst_26 = arith.constant dense<0.000000e+00> : vector<16x128xf32>
    %35 = tpu.matmul %33, %34, %cst_26 {dimension_numbers = #tpu.dot_dimension_numbers<[1], [0], [0], [1], [0, 0, 1, 1], [], []>} : vector<16x512xbf16>, vector<512x128xbf16>, vector<16x128xf32> -> vector<16x128xf32>
    %c0_27 = arith.constant 0 : index
    %c0_28 = arith.constant 0 : index
    %36 = vector.load %arg11[%c0_27, %c0_28] : memref<1x128xf32, #tpu.memory_space<vmem>>, vector<1x128xf32>
    %37 = vector.broadcast %36 : vector<1x128xf32> to vector<16x128xf32>
    %38 = arith.addf %35, %37 : vector<16x128xf32>
    %c0_29 = arith.constant 0 : index
    %c0_30 = arith.constant 0 : index
    %39 = vector.load %arg12[%c0_29, %c0_30] : memref<16x128xf32, #tpu.memory_space<vmem>>, vector<16x128xf32>
    tpu.vector_store %arg12[%c0_29, %c0_30], %38 {strides = array<i32>} : memref<16x128xf32, #tpu.memory_space<vmem>>, vector<16x128xf32>,
    return
  }
  func.func @transform_0(%arg0: i32) -> (i32, i32) {
    %c0_i32 = arith.constant 0 : i32
    %c0_i32_0 = arith.constant 0 : i32
    return %arg0, %c0_i32 : i32, i32
  }
  func.func @transform_1(%arg0: i32) -> (i32, i32) {
    %c0_i32 = arith.constant 0 : i32
    %c0_i32_0 = arith.constant 0 : i32
    %c0_i32_1 = arith.constant 0 : i32
    return %c0_i32, %c0_i32_0 : i32, i32
  }
  func.func @transform_2(%arg0: i32) -> (i32, i32) {
    %c0_i32 = arith.constant 0 : i32
    %c0_i32_0 = arith.constant 0 : i32
    %c0_i32_1 = arith.constant 0 : i32
    return %c0_i32, %c0_i32_0 : i32, i32
  }
  func.func @transform_3(%arg0: i32) -> (i32, i32) {
    %c0_i32 = arith.constant 0 : i32
    %c0_i32_0 = arith.constant 0 : i32
    %c0_i32_1 = arith.constant 0 : i32
    return %c0_i32, %c0_i32_0 : i32, i32
  }
  func.func @transform_4(%arg0: i32) -> (i32, i32) {
    %c0_i32 = arith.constant 0 : i32
    %c0_i32_0 = arith.constant 0 : i32
    %c0_i32_1 = arith.constant 0 : i32
    return %c0_i32, %c0_i32_0 : i32, i32
  }
  func.func @transform_5(%arg0: i32) -> (i32, i32) {
    %c0_i32 = arith.constant 0 : i32
    %c0_i32_0 = arith.constant 0 : i32
    %c0_i32_1 = arith.constant 0 : i32
    return %c0_i32, %c0_i32_0 : i32, i32
  }
  func.func @transform_6(%arg0: i32) -> (i32, i32) {
    %c0_i32 = arith.constant 0 : i32
    %c0_i32_0 = arith.constant 0 : i32
    %c0_i32_1 = arith.constant 0 : i32
    return %c0_i32, %c0_i32_0 : i32, i32
  }
  func.func @transform_7(%arg0: i32) -> (i32, i32) {
    %c0_i32 = arith.constant 0 : i32
    %c0_i32_0 = arith.constant 0 : i32
    %c0_i32_1 = arith.constant 0 : i32
    return %c0_i32, %c0_i32_0 : i32, i32
  }
  func.func @transform_8(%arg0: i32) -> (i32, i32) {
    %c0_i32 = arith.constant 0 : i32
    %c0_i32_0 = arith.constant 0 : i32
    %c0_i32_1 = arith.constant 0 : i32
    return %c0_i32, %c0_i32_0 : i32, i32
  }
  func.func @transform_9(%arg0: i32) -> (i32, i32) {
    %c0_i32 = arith.constant 0 : i32
    %c0_i32_0 = arith.constant 0 : i32
    %c0_i32_1 = arith.constant 0 : i32
    return %c0_i32, %c0_i32_0 : i32, i32
  }
  func.func @transform_10(%arg0: i32) -> (i32, i32) {
    %c0_i32 = arith.constant 0 : i32
    %c0_i32_0 = arith.constant 0 : i32
    %c0_i32_1 = arith.constant 0 : i32
    return %c0_i32, %c0_i32_0 : i32, i32
  }
  func.func @transform_11(%arg0: i32) -> (i32, i32) {
    %c0_i32 = arith.constant 0 : i32
    %c0_i32_0 = arith.constant 0 : i32
    return %arg0, %c0_i32 : i32, i32
  }
}

</mosaic_0001>

<llo_original>
// kernel: wae_discriminator_forward.1
$region0: #{wae_discriminator_forward.1}
  #allocation0 [shape = 'u32[]', space=smem, size = 0x4, offset = 0x4, fixed_abs, tag = 'smem constant byte address 0x4 - core index']
  #allocation1 [shape = 'u32[72,128]{1,0:T(1,128)}', space=vmem, size = 0x9000, scoped, tag = 'internal scratch']
  %s0 = inlined_call_operand.vmem [shape: f32[16,128], index: 0, kind: input, shape index: {}]
  %s1 = inlined_call_operand.vmem [shape: bf16[128,512], index: 1, kind: input, shape index: {}]
  %s2 = inlined_call_operand.vmem [shape: f32[1,512], index: 2, kind: input, shape index: {}]
  %s3 = inlined_call_operand.vmem [shape: bf16[512,512], index: 3, kind: input, shape index: {}]
  %s4 = inlined_call_operand.vmem [shape: f32[1,512], index: 4, kind: input, shape index: {}]
  %s5 = inlined_call_operand.vmem [shape: bf16[512,512], index: 5, kind: input, shape index: {}]
  %s6 = inlined_call_operand.vmem [shape: f32[1,512], index: 6, kind: input, shape index: {}]
  %s7 = inlined_call_operand.vmem [shape: bf16[512,512], index: 7, kind: input, shape index: {}]
  %s8 = inlined_call_operand.vmem [shape: f32[1,512], index: 8, kind: input, shape index: {}]
  %s9 = inlined_call_operand.vmem [shape: bf16[512,128], index: 9, kind: input, shape index: {}]
  %s10 = inlined_call_operand.vmem [shape: f32[1,128], index: 10, kind: input, shape index: {}]
  %s11 = inlined_call_operand.vmem [shape: f32[16,128], index: 11, kind: output, shape index: {}]
  %s12 = sld [smem:[#allocation0]]
  $region54: #{wae_discriminator_forward.1} parent=0
    _
  %s14 = ssub.s32 1, %s12
  %s15 = scalar_select 0, %s14, %s12
  // Predicated region
  $region2: #{wae_discriminator_forward.1} parent=0 // pred_check
    _
  $region3: #{wae_discriminator_forward.1} parent=0 // pred_check_branch
    %17 = sbr.rel (0) target = $region5
  $region4: #{wae_discriminator_forward.1} parent=0 // pred_region
    _
  $region5: #{wae_discriminator_forward.1} parent=0 // pred_fallthru
    _
  // Predicated region
  $region6: #{wae_discriminator_forward.1} parent=0 // pred_check
    _
  $region7: #{wae_discriminator_forward.1} parent=0 // pred_check_branch
    %19 = sbr.rel (0) target = $region9
  $region8: #{wae_discriminator_forward.1} parent=0 // pred_region
    _
  $region9: #{wae_discriminator_forward.1} parent=0 // pred_fallthru
    _
  // Predicated region
  $region10: #{wae_discriminator_forward.1} parent=0 // pred_check
    _
  $region11: #{wae_discriminator_forward.1} parent=0 // pred_check_branch
    %21 = sbr.rel (0) target = $region13
  $region12: #{wae_discriminator_forward.1} parent=0 // pred_region
    _
  $region13: #{wae_discriminator_forward.1} parent=0 // pred_fallthru
    _
  // Predicated region
  $region14: #{wae_discriminator_forward.1} parent=0 // pred_check
    _
  $region15: #{wae_discriminator_forward.1} parent=0 // pred_check_branch
    %23 = sbr.rel (0) target = $region17
  $region16: #{wae_discriminator_forward.1} parent=0 // pred_region
    _
  $region17: #{wae_discriminator_forward.1} parent=0 // pred_fallthru
    _
  // Predicated region
  $region18: #{wae_discriminator_forward.1} parent=0 // pred_check
    _
  $region19: #{wae_discriminator_forward.1} parent=0 // pred_check_branch
    %25 = sbr.rel (0) target = $region21
  $region20: #{wae_discriminator_forward.1} parent=0 // pred_region
    _
  $region21: #{wae_discriminator_forward.1} parent=0 // pred_fallthru
    _
  // Predicated region
  $region22: #{wae_discriminator_forward.1} parent=0 // pred_check
    _
  $region23: #{wae_discriminator_forward.1} parent=0 // pred_check_branch
    %27 = sbr.rel (0) target = $region25
  $region24: #{wae_discriminator_forward.1} parent=0 // pred_region
    _
  $region25: #{wae_discriminator_forward.1} parent=0 // pred_fallthru
    _
  // Predicated region
  $region26: #{wae_discriminator_forward.1} parent=0 // pred_check
    _
  $region27: #{wae_discriminator_forward.1} parent=0 // pred_check_branch
    %29 = sbr.rel (0) target = $region29
  $region28: #{wae_discriminator_forward.1} parent=0 // pred_region
    _
  $region29: #{wae_discriminator_forward.1} parent=0 // pred_fallthru
    _
  // Predicated region
  $region30: #{wae_discriminator_forward.1} parent=0 // pred_check
    _
  $region31: #{wae_discriminator_forward.1} parent=0 // pred_check_branch
    %31 = sbr.rel (0) target = $region33
  $region32: #{wae_discriminator_forward.1} parent=0 // pred_region
    _
  $region33: #{wae_discriminator_forward.1} parent=0 // pred_fallthru
    _
  // Predicated region
  $region34: #{wae_discriminator_forward.1} parent=0 // pred_check
    _
  $region35: #{wae_discriminator_forward.1} parent=0 // pred_check_branch
    %33 = sbr.rel (0) target = $region37
  $region36: #{wae_discriminator_forward.1} parent=0 // pred_region
    _
  $region37: #{wae_discriminator_forward.1} parent=0 // pred_fallthru
    _
  // Predicated region
  $region38: #{wae_discriminator_forward.1} parent=0 // pred_check
    _
  $region39: #{wae_discriminator_forward.1} parent=0 // pred_check_branch
    %35 = sbr.rel (0) target = $region41
  $region40: #{wae_discriminator_forward.1} parent=0 // pred_region
    _
  $region41: #{wae_discriminator_forward.1} parent=0 // pred_fallthru
    _
  // Predicated region
  $region42: #{wae_discriminator_forward.1} parent=0 // pred_check
    _
  $region43: #{wae_discriminator_forward.1} parent=0 // pred_check_branch
    %37 = sbr.rel (0) target = $region45
  $region44: #{wae_discriminator_forward.1} parent=0 // pred_region
    _
  $region45: #{wae_discriminator_forward.1} parent=0 // pred_fallthru
    _
  %v38 = vld [vmem:[%s0] sm:$0xff]
  %v39 = vld [vmem:[%s0 + $0x8] sm:$0xff]
  %v40 = vpack.c.bf16 %v39, %v38
  %v41 = vld [vmem:[%s1] sm:$0xff]
  %v42 = vld [vmem:[%s1 + $0x8] sm:$0xff]
  %v43 = vld [vmem:[%s1 + $0x10] sm:$0xff]
  %v44 = vld [vmem:[%s1 + $0x18] sm:$0xff]
  %v45 = vld [vmem:[%s1 + $0x20] sm:$0xff]
  %v46 = vld [vmem:[%s1 + $0x28] sm:$0xff]
  %v47 = vld [vmem:[%s1 + $0x30] sm:$0xff]
  %v48 = vld [vmem:[%s1 + $0x38] sm:$0xff]
  %v49 = vld [vmem:[%s1 + $0x40] sm:$0xff]
  %v50 = vld [vmem:[%s1 + $0x48] sm:$0xff]
  %v51 = vld [vmem:[%s1 + $0x50] sm:$0xff]
  %v52 = vld [vmem:[%s1 + $0x58] sm:$0xff]
  %v53 = vld [vmem:[%s1 + $0x60] sm:$0xff]
  %v54 = vld [vmem:[%s1 + $0x68] sm:$0xff]
  %v55 = vld [vmem:[%s1 + $0x70] sm:$0xff]
  %v56 = vld [vmem:[%s1 + $0x78] sm:$0xff]
  %v57 = vld [vmem:[%s1 + $0x80] sm:$0xff]
  %v58 = vld [vmem:[%s1 + $0x88] sm:$0xff]
  %v59 = vld [vmem:[%s1 + $0x90] sm:$0xff]
  %v60 = vld [vmem:[%s1 + $0x98] sm:$0xff]
  %v61 = vld [vmem:[%s1 + $0xa0] sm:$0xff]
  %v62 = vld [vmem:[%s1 + $0xa8] sm:$0xff]
  %v63 = vld [vmem:[%s1 + $0xb0] sm:$0xff]
  %v64 = vld [vmem:[%s1 + $0xb8] sm:$0xff]
  %v65 = vld [vmem:[%s1 + $0xc0] sm:$0xff]
  %v66 = vld [vmem:[%s1 + $0xc8] sm:$0xff]
  %v67 = vld [vmem:[%s1 + $0xd0] sm:$0xff]
  %v68 = vld [vmem:[%s1 + $0xd8] sm:$0xff]
  %v69 = vld [vmem:[%s1 + $0xe0] sm:$0xff]
  %v70 = vld [vmem:[%s1 + $0xe8] sm:$0xff]
  %v71 = vld [vmem:[%s1 + $0xf0] sm:$0xff]
  %v72 = vld [vmem:[%s1 + $0xf8] sm:$0xff]
  %v73 = vld [vmem:[%s2] sm:$0xf]
  %v75 = vperm.slane %v73, 0
  %v76 = vperm.slane %v73, 1
  %v77 = vperm.slane %v73, 2
  %v78 = vperm.slane %v73, 3
  %v115 = vunpack.c.l.b16 %v41
  %v116 = vunpack.c.h.b16 %v41
  %v117 = vunpack.c.l.b16 %v42
  %v118 = vunpack.c.h.b16 %v42
  %v119 = vunpack.c.l.b16 %v43
  %v120 = vunpack.c.h.b16 %v43
  %v121 = vunpack.c.l.b16 %v44
  %v122 = vunpack.c.h.b16 %v44
  %v123 = vunpack.c.l.b16 %v45
  %v124 = vunpack.c.h.b16 %v45
  %v125 = vunpack.c.l.b16 %v46
  %v126 = vunpack.c.h.b16 %v46
  %v127 = vunpack.c.l.b16 %v47
  %v128 = vunpack.c.h.b16 %v47
  %v129 = vunpack.c.l.b16 %v48
  %v130 = vunpack.c.h.b16 %v48
  %v131 = vunpack.c.l.b16 %v49
  %v132 = vunpack.c.h.b16 %v49
  %v133 = vunpack.c.l.b16 %v50
  %v134 = vunpack.c.h.b16 %v50
  %v135 = vunpack.c.l.b16 %v51
  %v136 = vunpack.c.h.b16 %v51
  %v137 = vunpack.c.l.b16 %v52
  %v138 = vunpack.c.h.b16 %v52
  %v139 = vunpack.c.l.b16 %v53
  %v140 = vunpack.c.h.b16 %v53
  %v141 = vunpack.c.l.b16 %v54
  %v142 = vunpack.c.h.b16 %v54
  %v143 = vunpack.c.l.b16 %v55
  %v144 = vunpack.c.h.b16 %v55
  %v145 = vunpack.c.l.b16 %v56
  %v146 = vunpack.c.h.b16 %v56
  %v147 = vunpack.c.l.b16 %v57
  %v148 = vunpack.c.h.b16 %v57
  %v149 = vunpack.c.l.b16 %v58
  %v150 = vunpack.c.h.b16 %v58
  %v151 = vunpack.c.l.b16 %v59
  %v152 = vunpack.c.h.b16 %v59
  %v153 = vunpack.c.l.b16 %v60
  %v154 = vunpack.c.h.b16 %v60
  %v155 = vunpack.c.l.b16 %v61
  %v156 = vunpack.c.h.b16 %v61
  %v157 = vunpack.c.l.b16 %v62
  %v158 = vunpack.c.h.b16 %v62
  %v159 = vunpack.c.l.b16 %v63
  %v160 = vunpack.c.h.b16 %v63
  %v161 = vunpack.c.l.b16 %v64
  %v162 = vunpack.c.h.b16 %v64
  %v163 = vunpack.c.l.b16 %v65
  %v164 = vunpack.c.h.b16 %v65
  %v165 = vunpack.c.l.b16 %v66
  %v166 = vunpack.c.h.b16 %v66
  %v167 = vunpack.c.l.b16 %v67
  %v168 = vunpack.c.h.b16 %v67
  %v169 = vunpack.c.l.b16 %v68
  %v170 = vunpack.c.h.b16 %v68
  %v171 = vunpack.c.l.b16 %v69
  %v172 = vunpack.c.h.b16 %v69
  %v173 = vunpack.c.l.b16 %v70
  %v174 = vunpack.c.h.b16 %v70
  %v175 = vunpack.c.l.b16 %v71
  %v176 = vunpack.c.h.b16 %v71
  %v177 = vunpack.c.l.b16 %v72
  %v178 = vunpack.c.h.b16 %v72
  %v179 = vpack.c.b16 %v119, %v115
  %v180 = vpack.c.b16 %v120, %v116
  %v181 = vpack.c.b16 %v121, %v117
  %v182 = vpack.c.b16 %v122, %v118
  %v183 = vpack.c.b16 %v127, %v123
  %v184 = vpack.c.b16 %v128, %v124
  %v185 = vpack.c.b16 %v129, %v125
  %v186 = vpack.c.b16 %v130, %v126
  %v187 = vpack.c.b16 %v135, %v131
  %v188 = vpack.c.b16 %v136, %v132
  %v189 = vpack.c.b16 %v137, %v133
  %v190 = vpack.c.b16 %v138, %v134
  %v191 = vpack.c.b16 %v143, %v139
  %v192 = vpack.c.b16 %v144, %v140
  %v193 = vpack.c.b16 %v145, %v141
  %v194 = vpack.c.b16 %v146, %v142
  %v195 = vpack.c.b16 %v151, %v147
  %v196 = vpack.c.b16 %v152, %v148
  %v197 = vpack.c.b16 %v153, %v149
  %v198 = vpack.c.b16 %v154, %v150
  %v199 = vpack.c.b16 %v159, %v155
  %v200 = vpack.c.b16 %v160, %v156
  %v201 = vpack.c.b16 %v161, %v157
  %v202 = vpack.c.b16 %v162, %v158
  %v203 = vpack.c.b16 %v167, %v163
  %v204 = vpack.c.b16 %v168, %v164
  %v205 = vpack.c.b16 %v169, %v165
  %v206 = vpack.c.b16 %v170, %v166
  %v207 = vpack.c.b16 %v175, %v171
  %v208 = vpack.c.b16 %v176, %v172
  %v209 = vpack.c.b16 %v177, %v173
  %v210 = vpack.c.b16 %v178, %v174
  %243 = vmatpush.bf16.msra.mxu0 %v207
  %244 = vmatpush.bf16.msra.mxu0 %v203
  %245 = vmatpush.bf16.msra.mxu0 %v199
  %246 = vmatpush.bf16.msra.mxu0 %v195
  %247 = vmatpush.bf16.msra.mxu0 %v191
  %248 = vmatpush.bf16.msra.mxu0 %v187
  %249 = vmatpush.bf16.msra.mxu0 %v183
  %250 = vmatpush.bf16.msra.mxu0 %v179
  %251 = vmatmul.bf16.gmra.mxu0 %v40
  %v252 = vpop.f32.mrf.mxu0
  %v253 = vadd.f32 %v75, %v252
  %v254 = vpop.f32.mrf.mxu0
  %v255 = vadd.f32 %v75, %v254
  %256 = vdwg.mxu0
  %257 = vmatpush.bf16.msra.mxu0 %v208
  %258 = vmatpush.bf16.msra.mxu0 %v204
  %259 = vmatpush.bf16.msra.mxu0 %v200
  %260 = vmatpush.bf16.msra.mxu0 %v196
  %261 = vmatpush.bf16.msra.mxu0 %v192
  %262 = vmatpush.bf16.msra.mxu0 %v188
  %263 = vmatpush.bf16.msra.mxu0 %v184
  %264 = vmatpush.bf16.msra.mxu0 %v180
  %265 = vmatmul.bf16.gmra.mxu0 %v40
  %v266 = vpop.f32.mrf.mxu0
  %v267 = vadd.f32 %v76, %v266
  %v268 = vpop.f32.mrf.mxu0
  %v269 = vadd.f32 %v76, %v268
  %270 = vdwg.mxu0
  %271 = vmatpush.bf16.msra.mxu0 %v209
  %272 = vmatpush.bf16.msra.mxu0 %v205
  %273 = vmatpush.bf16.msra.mxu0 %v201
  %274 = vmatpush.bf16.msra.mxu0 %v197
  %275 = vmatpush.bf16.msra.mxu0 %v193
  %276 = vmatpush.bf16.msra.mxu0 %v189
  %277 = vmatpush.bf16.msra.mxu0 %v185
  %278 = vmatpush.bf16.msra.mxu0 %v181
  %279 = vmatmul.bf16.gmra.mxu0 %v40
  %v280 = vpop.f32.mrf.mxu0
  %v281 = vadd.f32 %v77, %v280
  %v282 = vpop.f32.mrf.mxu0
  %v283 = vadd.f32 %v77, %v282
  %284 = vdwg.mxu0
  %285 = vmatpush.bf16.msra.mxu0 %v210
  %286 = vmatpush.bf16.msra.mxu0 %v206
  %287 = vmatpush.bf16.msra.mxu0 %v202
  %288 = vmatpush.bf16.msra.mxu0 %v198
  %289 = vmatpush.bf16.msra.mxu0 %v194
  %290 = vmatpush.bf16.msra.mxu0 %v190
  %291 = vmatpush.bf16.msra.mxu0 %v186
  %292 = vmatpush.bf16.msra.mxu0 %v182
  %293 = vmatmul.bf16.gmra.mxu0 %v40
  %v294 = vpop.f32.mrf.mxu0
  %v295 = vadd.f32 %v78, %v294
  %v296 = vpop.f32.mrf.mxu0
  %v297 = vadd.f32 %v78, %v296
  %298 = vdwg.mxu0
  %v299 = vmax.f32 %v253, 0.0
  %v300 = vmax.f32 %v267, 0.0
  %v301 = vmax.f32 %v281, 0.0
  %v302 = vmax.f32 %v295, 0.0
  %v303 = vmax.f32 %v255, 0.0
  %v304 = vmax.f32 %v269, 0.0
  %v305 = vmax.f32 %v283, 0.0
  %v306 = vmax.f32 %v297, 0.0
  %v307 = vpack.c.bf16 %v303, %v299
  %v308 = vpack.c.bf16 %v304, %v300
  %v309 = vpack.c.bf16 %v305, %v301
  %v310 = vpack.c.bf16 %v306, %v302
  %v311 = vld [vmem:[%s3] sm:$0xff]
  %v312 = vld [vmem:[%s3 + $0x8] sm:$0xff]
  %v313 = vld [vmem:[%s3 + $0x10] sm:$0xff]
  %v314 = vld [vmem:[%s3 + $0x18] sm:$0xff]
  %v315 = vld [vmem:[%s3 + $0x20] sm:$0xff]
  %v316 = vld [vmem:[%s3 + $0x28] sm:$0xff]
  %v317 = vld [vmem:[%s3 + $0x30] sm:$0xff]
  %v318 = vld [vmem:[%s3 + $0x38] sm:$0xff]
  %v319 = vld [vmem:[%s3 + $0x40] sm:$0xff]
  %v320 = vld [vmem:[%s3 + $0x48] sm:$0xff]
  %v321 = vld [vmem:[%s3 + $0x50] sm:$0xff]
  %v322 = vld [vmem:[%s3 + $0x58] sm:$0xff]
  %v323 = vld [vmem:[%s3 + $0x60] sm:$0xff]
  %v324 = vld [vmem:[%s3 + $0x68] sm:$0xff]
  %v325 = vld [vmem:[%s3 + $0x70] sm:$0xff]
  %v326 = vld [vmem:[%s3 + $0x78] sm:$0xff]
  %v327 = vld [vmem:[%s3 + $0x80] sm:$0xff]
  %v328 = vld [vmem:[%s3 + $0x88] sm:$0xff]
  %v329 = vld [vmem:[%s3 + $0x90] sm:$0xff]
  %v330 = vld [vmem:[%s3 + $0x98] sm:$0xff]
  %v331 = vld [vmem:[%s3 + $0xa0] sm:$0xff]
  %v332 = vld [vmem:[%s3 + $0xa8] sm:$0xff]
  %v333 = vld [vmem:[%s3 + $0xb0] sm:$0xff]
  %v334 = vld [vmem:[%s3 + $0xb8] sm:$0xff]
  %v335 = vld [vmem:[%s3 + $0xc0] sm:$0xff]
  %v336 = vld [vmem:[%s3 + $0xc8] sm:$0xff]
  %v337 = vld [vmem:[%s3 + $0xd0] sm:$0xff]
  %v338 = vld [vmem:[%s3 + $0xd8] sm:$0xff]
  %v339 = vld [vmem:[%s3 + $0xe0] sm:$0xff]
  %v340 = vld [vmem:[%s3 + $0xe8] sm:$0xff]
  %v341 = vld [vmem:[%s3 + $0xf0] sm:$0xff]
  %v342 = vld [vmem:[%s3 + $0xf8] sm:$0xff]
  %v343 = vld [vmem:[%s3 + $0x100] sm:$0xff]
  %v344 = vld [vmem:[%s3 + $0x108] sm:$0xff]
  %v345 = vld [vmem:[%s3 + $0x110] sm:$0xff]
  %v346 = vld [vmem:[%s3 + $0x118] sm:$0xff]
  %v347 = vld [vmem:[%s3 + $0x120] sm:$0xff]
  %v348 = vld [vmem:[%s3 + $0x128] sm:$0xff]
  %v349 = vld [vmem:[%s3 + $0x130] sm:$0xff]
  %v350 = vld [vmem:[%s3 + $0x138] sm:$0xff]
  %v351 = vld [vmem:[%s3 + $0x140] sm:$0xff]
  %v352 = vld [vmem:[%s3 + $0x148] sm:$0xff]
  %v353 = vld [vmem:[%s3 + $0x150] sm:$0xff]
  %v354 = vld [vmem:[%s3 + $0x158] sm:$0xff]
  %v355 = vld [vmem:[%s3 + $0x160] sm:$0xff]
  %v356 = vld [vmem:[%s3 + $0x168] sm:$0xff]
  %v357 = vld [vmem:[%s3 + $0x170] sm:$0xff]
  %v358 = vld [vmem:[%s3 + $0x178] sm:$0xff]
  %v359 = vld [vmem:[%s3 + $0x180] sm:$0xff]
  %v360 = vld [vmem:[%s3 + $0x188] sm:$0xff]
  %v361 = vld [vmem:[%s3 + $0x190] sm:$0xff]
  %v362 = vld [vmem:[%s3 + $0x198] sm:$0xff]
  %v363 = vld [vmem:[%s3 + $0x1a0] sm:$0xff]
  %v364 = vld [vmem:[%s3 + $0x1a8] sm:$0xff]
  %v365 = vld [vmem:[%s3 + $0x1b0] sm:$0xff]
  %v366 = vld [vmem:[%s3 + $0x1b8] sm:$0xff]
  %v367 = vld [vmem:[%s3 + $0x1c0] sm:$0xff]
  %v368 = vld [vmem:[%s3 + $0x1c8] sm:$0xff]
  %v369 = vld [vmem:[%s3 + $0x1d0] sm:$0xff]
  %v370 = vld [vmem:[%s3 + $0x1d8] sm:$0xff]
  %v371 = vld [vmem:[%s3 + $0x1e0] sm:$0xff]
  %v372 = vld [vmem:[%s3 + $0x1e8] sm:$0xff]
  %v373 = vld [vmem:[%s3 + $0x1f0] sm:$0xff]
  %v374 = vld [vmem:[%s3 + $0x1f8] sm:$0xff]
  %v375 = vld [vmem:[%s3 + $0x200] sm:$0xff]
  %v376 = vld [vmem:[%s3 + $0x208] sm:$0xff]
  %v377 = vld [vmem:[%s3 + $0x210] sm:$0xff]
  %v378 = vld [vmem:[%s3 + $0x218] sm:$0xff]
  %v379 = vld [vmem:[%s3 + $0x220] sm:$0xff]
  %v380 = vld [vmem:[%s3 + $0x228] sm:$0xff]
  %v381 = vld [vmem:[%s3 + $0x230] sm:$0xff]
  %v382 = vld [vmem:[%s3 + $0x238] sm:$0xff]
  %v383 = vld [vmem:[%s3 + $0x240] sm:$0xff]
  %v384 = vld [vmem:[%s3 + $0x248] sm:$0xff]
  %v385 = vld [vmem:[%s3 + $0x250] sm:$0xff]
  %v386 = vld [vmem:[%s3 + $0x258] sm:$0xff]
  %v387 = vld [vmem:[%s3 + $0x260] sm:$0xff]
  %v388 = vld [vmem:[%s3 + $0x268] sm:$0xff]
  %v389 = vld [vmem:[%s3 + $0x270] sm:$0xff]
  %v390 = vld [vmem:[%s3 + $0x278] sm:$0xff]
  %v391 = vld [vmem:[%s3 + $0x280] sm:$0xff]
  %v392 = vld [vmem:[%s3 + $0x288] sm:$0xff]
  %v393 = vld [vmem:[%s3 + $0x290] sm:$0xff]
  %v394 = vld [vmem:[%s3 + $0x298] sm:$0xff]
  %v395 = vld [vmem:[%s3 + $0x2a0] sm:$0xff]
  %v396 = vld [vmem:[%s3 + $0x2a8] sm:$0xff]
  %v397 = vld [vmem:[%s3 + $0x2b0] sm:$0xff]
  %v398 = vld [vmem:[%s3 + $0x2b8] sm:$0xff]
  %v399 = vld [vmem:[%s3 + $0x2c0] sm:$0xff]
  %v400 = vld [vmem:[%s3 + $0x2c8] sm:$0xff]
  %v401 = vld [vmem:[%s3 + $0x2d0] sm:$0xff]
  %v402 = vld [vmem:[%s3 + $0x2d8] sm:$0xff]
  %v403 = vld [vmem:[%s3 + $0x2e0] sm:$0xff]
  %v404 = vld [vmem:[%s3 + $0x2e8] sm:$0xff]
  %v405 = vld [vmem:[%s3 + $0x2f0] sm:$0xff]
  %v406 = vld [vmem:[%s3 + $0x2f8] sm:$0xff]
  %v407 = vld [vmem:[%s3 + $0x300] sm:$0xff]
  %v408 = vld [vmem:[%s3 + $0x308] sm:$0xff]
  %v409 = vld [vmem:[%s3 + $0x310] sm:$0xff]
  %v410 = vld [vmem:[%s3 + $0x318] sm:$0xff]
  %v411 = vld [vmem:[%s3 + $0x320] sm:$0xff]
  %v412 = vld [vmem:[%s3 + $0x328] sm:$0xff]
  %v413 = vld [vmem:[%s3 + $0x330] sm:$0xff]
  %v414 = vld [vmem:[%s3 + $0x338] sm:$0xff]
  %v415 = vld [vmem:[%s3 + $0x340] sm:$0xff]
  %v416 = vld [vmem:[%s3 + $0x348] sm:$0xff]
  %v417 = vld [vmem:[%s3 + $0x350] sm:$0xff]
  %v418 = vld [vmem:[%s3 + $0x358] sm:$0xff]
  %v419 = vld [vmem:[%s3 + $0x360] sm:$0xff]
  %v420 = vld [vmem:[%s3 + $0x368] sm:$0xff]
  %v421 = vld [vmem:[%s3 + $0x370] sm:$0xff]
  %v422 = vld [vmem:[%s3 + $0x378] sm:$0xff]
  %v423 = vld [vmem:[%s3 + $0x380] sm:$0xff]
  %v424 = vld [vmem:[%s3 + $0x388] sm:$0xff]
  %v425 = vld [vmem:[%s3 + $0x390] sm:$0xff]
  %v426 = vld [vmem:[%s3 + $0x398] sm:$0xff]
  %v427 = vld [vmem:[%s3 + $0x3a0] sm:$0xff]
  %v428 = vld [vmem:[%s3 + $0x3a8] sm:$0xff]
  %v429 = vld [vmem:[%s3 + $0x3b0] sm:$0xff]
  %v430 = vld [vmem:[%s3 + $0x3b8] sm:$0xff]
  %v431 = vld [vmem:[%s3 + $0x3c0] sm:$0xff]
  %v432 = vld [vmem:[%s3 + $0x3c8] sm:$0xff]
  %v433 = vld [vmem:[%s3 + $0x3d0] sm:$0xff]
  %v434 = vld [vmem:[%s3 + $0x3d8] sm:$0xff]
  %v435 = vld [vmem:[%s3 + $0x3e0] sm:$0xff]
  %v436 = vld [vmem:[%s3 + $0x3e8] sm:$0xff]
  %v437 = vld [vmem:[%s3 + $0x3f0] sm:$0xff]
  %v438 = vld [vmem:[%s3 + $0x3f8] sm:$0xff]
  %v439 = vld [vmem:[%s4] sm:$0xf]
  %v441 = vperm.slane %v439, 0
  %v442 = vperm.slane %v439, 1
  %v443 = vperm.slane %v439, 2
  %v444 = vperm.slane %v439, 3
  %v577 = vunpack.c.l.b16 %v311
  %v578 = vunpack.c.h.b16 %v311
  %v579 = vunpack.c.l.b16 %v312
  %v580 = vunpack.c.h.b16 %v312
  %v581 = vunpack.c.l.b16 %v313
  %v582 = vunpack.c.h.b16 %v313
  %v583 = vunpack.c.l.b16 %v314
  %v584 = vunpack.c.h.b16 %v314
  %v585 = vunpack.c.l.b16 %v315
  %v586 = vunpack.c.h.b16 %v315
  %v587 = vunpack.c.l.b16 %v316
  %v588 = vunpack.c.h.b16 %v316
  %v589 = vunpack.c.l.b16 %v317
  %v590 = vunpack.c.h.b16 %v317
  %v591 = vunpack.c.l.b16 %v318
  %v592 = vunpack.c.h.b16 %v318
  %v593 = vunpack.c.l.b16 %v319
  %v594 = vunpack.c.h.b16 %v319
  %v595 = vunpack.c.l.b16 %v320
  %v596 = vunpack.c.h.b16 %v320
  %v597 = vunpack.c.l.b16 %v321
  %v598 = vunpack.c.h.b16 %v321
  %v599 = vunpack.c.l.b16 %v322
  %v600 = vunpack.c.h.b16 %v322
  %v601 = vunpack.c.l.b16 %v323
  %v602 = vunpack.c.h.b16 %v323
  %v603 = vunpack.c.l.b16 %v324
  %v604 = vunpack.c.h.b16 %v324
  %v605 = vunpack.c.l.b16 %v325
  %v606 = vunpack.c.h.b16 %v325
  %v607 = vunpack.c.l.b16 %v326
  %v608 = vunpack.c.h.b16 %v326
  %v609 = vunpack.c.l.b16 %v327
  %v610 = vunpack.c.h.b16 %v327
  %v611 = vunpack.c.l.b16 %v328
  %v612 = vunpack.c.h.b16 %v328
  %v613 = vunpack.c.l.b16 %v329
  %v614 = vunpack.c.h.b16 %v329
  %v615 = vunpack.c.l.b16 %v330
  %v616 = vunpack.c.h.b16 %v330
  %v617 = vunpack.c.l.b16 %v331
  %v618 = vunpack.c.h.b16 %v331
  %v619 = vunpack.c.l.b16 %v332
  %v620 = vunpack.c.h.b16 %v332
  %v621 = vunpack.c.l.b16 %v333
  %v622 = vunpack.c.h.b16 %v333
  %v623 = vunpack.c.l.b16 %v334
  %v624 = vunpack.c.h.b16 %v334
  %v625 = vunpack.c.l.b16 %v335
  %v626 = vunpack.c.h.b16 %v335
  %v627 = vunpack.c.l.b16 %v336
  %v628 = vunpack.c.h.b16 %v336
  %v629 = vunpack.c.l.b16 %v337
  %v630 = vunpack.c.h.b16 %v337
  %v631 = vunpack.c.l.b16 %v338
  %v632 = vunpack.c.h.b16 %v338
  %v633 = vunpack.c.l.b16 %v339
  %v634 = vunpack.c.h.b16 %v339
  %v635 = vunpack.c.l.b16 %v340
  %v636 = vunpack.c.h.b16 %v340
  %v637 = vunpack.c.l.b16 %v341
  %v638 = vunpack.c.h.b16 %v341
  %v639 = vunpack.c.l.b16 %v342
  %v640 = vunpack.c.h.b16 %v342
  %v641 = vunpack.c.l.b16 %v343
  %v642 = vunpack.c.h.b16 %v343
  %v643 = vunpack.c.l.b16 %v344
  %v644 = vunpack.c.h.b16 %v344
  %v645 = vunpack.c.l.b16 %v345
  %v646 = vunpack.c.h.b16 %v345
  %v647 = vunpack.c.l.b16 %v346
  %v648 = vunpack.c.h.b16 %v346
  %v649 = vunpack.c.l.b16 %v347
  %v650 = vunpack.c.h.b16 %v347
  %v651 = vunpack.c.l.b16 %v348
  %v652 = vunpack.c.h.b16 %v348
  %v653 = vunpack.c.l.b16 %v349
  %v654 = vunpack.c.h.b16 %v349
  %v655 = vunpack.c.l.b16 %v350
  %v656 = vunpack.c.h.b16 %v350
  %v657 = vunpack.c.l.b16 %v351
  %v658 = vunpack.c.h.b16 %v351
  %v659 = vunpack.c.l.b16 %v352
  %v660 = vunpack.c.h.b16 %v352
  %v661 = vunpack.c.l.b16 %v353
  %v662 = vunpack.c.h.b16 %v353
  %v663 = vunpack.c.l.b16 %v354
  %v664 = vunpack.c.h.b16 %v354
  %v665 = vunpack.c.l.b16 %v355
  %v666 = vunpack.c.h.b16 %v355
  %v667 = vunpack.c.l.b16 %v356
  %v668 = vunpack.c.h.b16 %v356
  %v669 = vunpack.c.l.b16 %v357
  %v670 = vunpack.c.h.b16 %v357
  %v671 = vunpack.c.l.b16 %v358
  %v672 = vunpack.c.h.b16 %v358
  %v673 = vunpack.c.l.b16 %v359
  %v674 = vunpack.c.h.b16 %v359
  %v675 = vunpack.c.l.b16 %v360
  %v676 = vunpack.c.h.b16 %v360
  %v677 = vunpack.c.l.b16 %v361
  %v678 = vunpack.c.h.b16 %v361
  %v679 = vunpack.c.l.b16 %v362
  %v680 = vunpack.c.h.b16 %v362
  %v681 = vunpack.c.l.b16 %v363
  %v682 = vunpack.c.h.b16 %v363
  %v683 = vunpack.c.l.b16 %v364
  %v684 = vunpack.c.h.b16 %v364
  %v685 = vunpack.c.l.b16 %v365
  %v686 = vunpack.c.h.b16 %v365
  %v687 = vunpack.c.l.b16 %v366
  %v688 = vunpack.c.h.b16 %v366
  %v689 = vunpack.c.l.b16 %v367
  %v690 = vunpack.c.h.b16 %v367
  %v691 = vunpack.c.l.b16 %v368
  %v692 = vunpack.c.h.b16 %v368
  %v693 = vunpack.c.l.b16 %v369
  %v694 = vunpack.c.h.b16 %v369
  %v695 = vunpack.c.l.b16 %v370
  %v696 = vunpack.c.h.b16 %v370
  %v697 = vunpack.c.l.b16 %v371
  %v698 = vunpack.c.h.b16 %v371
  %v699 = vunpack.c.l.b16 %v372
  %v700 = vunpack.c.h.b16 %v372
  %v701 = vunpack.c.l.b16 %v373
  %v702 = vunpack.c.h.b16 %v373
  %v703 = vunpack.c.l.b16 %v374
  %v704 = vunpack.c.h.b16 %v374
  %v705 = vunpack.c.l.b16 %v375
  %v706 = vunpack.c.h.b16 %v375
  %v707 = vunpack.c.l.b16 %v376
  %v708 = vunpack.c.h.b16 %v376
  %v709 = vunpack.c.l.b16 %v377
  %v710 = vunpack.c.h.b16 %v377
  %v711 = vunpack.c.l.b16 %v378
  %v712 = vunpack.c.h.b16 %v378
  %v713 = vunpack.c.l.b16 %v379
  %v714 = vunpack.c.h.b16 %v379
  %v715 = vunpack.c.l.b16 %v380
  %v716 = vunpack.c.h.b16 %v380
  %v717 = vunpack.c.l.b16 %v381
  %v718 = vunpack.c.h.b16 %v381
  %v719 = vunpack.c.l.b16 %v382
  %v720 = vunpack.c.h.b16 %v382
  %v721 = vunpack.c.l.b16 %v383
  %v722 = vunpack.c.h.b16 %v383
  %v723 = vunpack.c.l.b16 %v384
  %v724 = vunpack.c.h.b16 %v384
  %v725 = vunpack.c.l.b16 %v385
  %v726 = vunpack.c.h.b16 %v385
  %v727 = vunpack.c.l.b16 %v386
  %v728 = vunpack.c.h.b16 %v386
  %v729 = vunpack.c.l.b16 %v387
  %v730 = vunpack.c.h.b16 %v387
  %v731 = vunpack.c.l.b16 %v388
  %v732 = vunpack.c.h.b16 %v388
  %v733 = vunpack.c.l.b16 %v389
  %v734 = vunpack.c.h.b16 %v389
  %v735 = vunpack.c.l.b16 %v390
  %v736 = vunpack.c.h.b16 %v390
  %v737 = vunpack.c.l.b16 %v391
  %v738 = vunpack.c.h.b16 %v391
  %v739 = vunpack.c.l.b16 %v392
  %v740 = vunpack.c.h.b16 %v392
  %v741 = vunpack.c.l.b16 %v393
  %v742 = vunpack.c.h.b16 %v393
  %v743 = vunpack.c.l.b16 %v394
  %v744 = vunpack.c.h.b16 %v394
  %v745 = vunpack.c.l.b16 %v395
  %v746 = vunpack.c.h.b16 %v395
  %v747 = vunpack.c.l.b16 %v396
  %v748 = vunpack.c.h.b16 %v396
  %v749 = vunpack.c.l.b16 %v397
  %v750 = vunpack.c.h.b16 %v397
  %v751 = vunpack.c.l.b16 %v398
  %v752 = vunpack.c.h.b16 %v398
  %v753 = vunpack.c.l.b16 %v399
  %v754 = vunpack.c.h.b16 %v399
  %v755 = vunpack.c.l.b16 %v400
  %v756 = vunpack.c.h.b16 %v400
  %v757 = vunpack.c.l.b16 %v401
  %v758 = vunpack.c.h.b16 %v401
  %v759 = vunpack.c.l.b16 %v402
  %v760 = vunpack.c.h.b16 %v402
  %v761 = vunpack.c.l.b16 %v403
  %v762 = vunpack.c.h.b16 %v403
  %v763 = vunpack.c.l.b16 %v404
  %v764 = vunpack.c.h.b16 %v404
  %v765 = vunpack.c.l.b16 %v405
  %v766 = vunpack.c.h.b16 %v405
  %v767 = vunpack.c.l.b16 %v406
  %v768 = vunpack.c.h.b16 %v406
  %v769 = vunpack.c.l.b16 %v407
  %v770 = vunpack.c.h.b16 %v407
  %v771 = vunpack.c.l.b16 %v408
  %v772 = vunpack.c.h.b16 %v408
  %v773 = vunpack.c.l.b16 %v409
  %v774 = vunpack.c.h.b16 %v409
  %v775 = vunpack.c.l.b16 %v410
  %v776 = vunpack.c.h.b16 %v410
  %v777 = vunpack.c.l.b16 %v411
  %v778 = vunpack.c.h.b16 %v411
  %v779 = vunpack.c.l.b16 %v412
  %v780 = vunpack.c.h.b16 %v412
  %v781 = vunpack.c.l.b16 %v413
  %v782 = vunpack.c.h.b16 %v413
  %v783 = vunpack.c.l.b16 %v414
  %v784 = vunpack.c.h.b16 %v414
  %v785 = vunpack.c.l.b16 %v415
  %v786 = vunpack.c.h.b16 %v415
  %v787 = vunpack.c.l.b16 %v416
  %v788 = vunpack.c.h.b16 %v416
  %v789 = vunpack.c.l.b16 %v417
  %v790 = vunpack.c.h.b16 %v417
  %v791 = vunpack.c.l.b16 %v418
  %v792 = vunpack.c.h.b16 %v418
  %v793 = vunpack.c.l.b16 %v419
  %v794 = vunpack.c.h.b16 %v419
  %v795 = vunpack.c.l.b16 %v420
  %v796 = vunpack.c.h.b16 %v420
  %v797 = vunpack.c.l.b16 %v421
  %v798 = vunpack.c.h.b16 %v421
  %v799 = vunpack.c.l.b16 %v422
  %v800 = vunpack.c.h.b16 %v422
  %v801 = vunpack.c.l.b16 %v423
  %v802 = vunpack.c.h.b16 %v423
  %v803 = vunpack.c.l.b16 %v424
  %v804 = vunpack.c.h.b16 %v424
  %v805 = vunpack.c.l.b16 %v425
  %v806 = vunpack.c.h.b16 %v425
  %v807 = vunpack.c.l.b16 %v426
  %v808 = vunpack.c.h.b16 %v426
  %v809 = vunpack.c.l.b16 %v427
  %v810 = vunpack.c.h.b16 %v427
  %v811 = vunpack.c.l.b16 %v428
  %v812 = vunpack.c.h.b16 %v428
  %v813 = vunpack.c.l.b16 %v429
  %v814 = vunpack.c.h.b16 %v429
  %v815 = vunpack.c.l.b16 %v430
  %v816 = vunpack.c.h.b16 %v430
  %v817 = vunpack.c.l.b16 %v431
  %v818 = vunpack.c.h.b16 %v431
  %v819 = vunpack.c.l.b16 %v432
  %v820 = vunpack.c.h.b16 %v432
  %v821 = vunpack.c.l.b16 %v433
  %v822 = vunpack.c.h.b16 %v433
  %v823 = vunpack.c.l.b16 %v434
  %v824 = vunpack.c.h.b16 %v434
  %v825 = vunpack.c.l.b16 %v435
  %v826 = vunpack.c.h.b16 %v435
  %v827 = vunpack.c.l.b16 %v436
  %v828 = vunpack.c.h.b16 %v436
  %v829 = vunpack.c.l.b16 %v437
  %v830 = vunpack.c.h.b16 %v437
  %v831 = vunpack.c.l.b16 %v438
  %v832 = vunpack.c.h.b16 %v438
  %v833 = vpack.c.b16 %v581, %v577
  %v834 = vpack.c.b16 %v582, %v578
  %v835 = vpack.c.b16 %v583, %v579
  %v836 = vpack.c.b16 %v584, %v580
  %v837 = vpack.c.b16 %v589, %v585
  %v838 = vpack.c.b16 %v590, %v586
  %v839 = vpack.c.b16 %v591, %v587
  %v840 = vpack.c.b16 %v592, %v588
  %v841 = vpack.c.b16 %v597, %v593
  %v842 = vpack.c.b16 %v598, %v594
  %v843 = vpack.c.b16 %v599, %v595
  %v844 = vpack.c.b16 %v600, %v596
  %v845 = vpack.c.b16 %v605, %v601
  %v846 = vpack.c.b16 %v606, %v602
  %v847 = vpack.c.b16 %v607, %v603
  %v848 = vpack.c.b16 %v608, %v604
  %v849 = vpack.c.b16 %v613, %v609
  %v850 = vpack.c.b16 %v614, %v610
  %v851 = vpack.c.b16 %v615, %v611
  %v852 = vpack.c.b16 %v616, %v612
  %v853 = vpack.c.b16 %v621, %v617
  %v854 = vpack.c.b16 %v622, %v618
  %v855 = vpack.c.b16 %v623, %v619
  %v856 = vpack.c.b16 %v624, %v620
  %v857 = vpack.c.b16 %v629, %v625
  %v858 = vpack.c.b16 %v630, %v626
  %v859 = vpack.c.b16 %v631, %v627
  %v860 = vpack.c.b16 %v632, %v628
  %v861 = vpack.c.b16 %v637, %v633
  %v862 = vpack.c.b16 %v638, %v634
  %v863 = vpack.c.b16 %v639, %v635
  %v864 = vpack.c.b16 %v640, %v636
  %v865 = vpack.c.b16 %v645, %v641
  %v866 = vpack.c.b16 %v646, %v642
  %v867 = vpack.c.b16 %v647, %v643
  %v868 = vpack.c.b16 %v648, %v644
  %v869 = vpack.c.b16 %v653, %v649
  %v870 = vpack.c.b16 %v654, %v650
  %v871 = vpack.c.b16 %v655, %v651
  %v872 = vpack.c.b16 %v656, %v652
  %v873 = vpack.c.b16 %v661, %v657
  %v874 = vpack.c.b16 %v662, %v658
  %v875 = vpack.c.b16 %v663, %v659
  %v876 = vpack.c.b16 %v664, %v660
  %v877 = vpack.c.b16 %v669, %v665
  %v878 = vpack.c.b16 %v670, %v666
  %v879 = vpack.c.b16 %v671, %v667
  %v880 = vpack.c.b16 %v672, %v668
  %v881 = vpack.c.b16 %v677, %v673
  %v882 = vpack.c.b16 %v678, %v674
  %v883 = vpack.c.b16 %v679, %v675
  %v884 = vpack.c.b16 %v680, %v676
  %v885 = vpack.c.b16 %v685, %v681
  %v886 = vpack.c.b16 %v686, %v682
  %v887 = vpack.c.b16 %v687, %v683
  %v888 = vpack.c.b16 %v688, %v684
  %v889 = vpack.c.b16 %v693, %v689
  %v890 = vpack.c.b16 %v694, %v690
  %v891 = vpack.c.b16 %v695, %v691
  %v892 = vpack.c.b16 %v696, %v692
  %v893 = vpack.c.b16 %v701, %v697
  %v894 = vpack.c.b16 %v702, %v698
  %v895 = vpack.c.b16 %v703, %v699
  %v896 = vpack.c.b16 %v704, %v700
  %v897 = vpack.c.b16 %v709, %v705
  %v898 = vpack.c.b16 %v710, %v706
  %v899 = vpack.c.b16 %v711, %v707
  %v900 = vpack.c.b16 %v712, %v708
  %v901 = vpack.c.b16 %v717, %v713
  %v902 = vpack.c.b16 %v718, %v714
  %v903 = vpack.c.b16 %v719, %v715
  %v904 = vpack.c.b16 %v720, %v716
  %v905 = vpack.c.b16 %v725, %v721
  %v906 = vpack.c.b16 %v726, %v722
  %v907 = vpack.c.b16 %v727, %v723
  %v908 = vpack.c.b16 %v728, %v724
  %v909 = vpack.c.b16 %v733, %v729
  %v910 = vpack.c.b16 %v734, %v730
  %v911 = vpack.c.b16 %v735, %v731
  %v912 = vpack.c.b16 %v736, %v732
  %v913 = vpack.c.b16 %v741, %v737
  %v914 = vpack.c.b16 %v742, %v738
  %v915 = vpack.c.b16 %v743, %v739
  %v916 = vpack.c.b16 %v744, %v740
  %v917 = vpack.c.b16 %v749, %v745
  %v918 = vpack.c.b16 %v750, %v746
  %v919 = vpack.c.b16 %v751, %v747
  %v920 = vpack.c.b16 %v752, %v748
  %v921 = vpack.c.b16 %v757, %v753
  %v922 = vpack.c.b16 %v758, %v754
  %v923 = vpack.c.b16 %v759, %v755
  %v924 = vpack.c.b16 %v760, %v756
  %v925 = vpack.c.b16 %v765, %v761
  %v926 = vpack.c.b16 %v766, %v762
  %v927 = vpack.c.b16 %v767, %v763
  %v928 = vpack.c.b16 %v768, %v764
  %v929 = vpack.c.b16 %v773, %v769
  %v930 = vpack.c.b16 %v774, %v770
  %v931 = vpack.c.b16 %v775, %v771
  %v932 = vpack.c.b16 %v776, %v772
  %v933 = vpack.c.b16 %v781, %v777
  %v934 = vpack.c.b16 %v782, %v778
  %v935 = vpack.c.b16 %v783, %v779
  %v936 = vpack.c.b16 %v784, %v780
  %v937 = vpack.c.b16 %v789, %v785
  %v938 = vpack.c.b16 %v790, %v786
  %v939 = vpack.c.b16 %v791, %v787
  %v940 = vpack.c.b16 %v792, %v788
  %v941 = vpack.c.b16 %v797, %v793
  %v942 = vpack.c.b16 %v798, %v794
  %v943 = vpack.c.b16 %v799, %v795
  %v944 = vpack.c.b16 %v800, %v796
  %v945 = vpack.c.b16 %v805, %v801
  %v946 = vpack.c.b16 %v806, %v802
  %v947 = vpack.c.b16 %v807, %v803
  %v948 = vpack.c.b16 %v808, %v804
  %v949 = vpack.c.b16 %v813, %v809
  %v950 = vpack.c.b16 %v814, %v810
  %v951 = vpack.c.b16 %v815, %v811
  %v952 = vpack.c.b16 %v816, %v812
  %v953 = vpack.c.b16 %v821, %v817
  %v954 = vpack.c.b16 %v822, %v818
  %v955 = vpack.c.b16 %v823, %v819
  %v956 = vpack.c.b16 %v824, %v820
  %v957 = vpack.c.b16 %v829, %v825
  %v958 = vpack.c.b16 %v830, %v826
  %v959 = vpack.c.b16 %v831, %v827
  %v960 = vpack.c.b16 %v832, %v828
  %1089 = vmatpush.bf16.msra.mxu0 %v861
  %1090 = vmatpush.bf16.msra.mxu0 %v857
  %1091 = vmatpush.bf16.msra.mxu0 %v853
  %1092 = vmatpush.bf16.msra.mxu0 %v849
  %1093 = vmatpush.bf16.msra.mxu0 %v845
  %1094 = vmatpush.bf16.msra.mxu0 %v841
  %1095 = vmatpush.bf16.msra.mxu0 %v837
  %1096 = vmatpush.bf16.msra.mxu0 %v833
  %1097 = vmatmul.bf16.gmra.mxu0 %v307
  %v1098 = vpop.f32.mrf.mxu0
  %v1099 = vadd.f32 %v441, %v1098
  %v1100 = vpop.f32.mrf.mxu0
  %v1101 = vadd.f32 %v441, %v1100
  %1102 = vdwg.mxu0
  %1103 = vmatpush.bf16.msra.mxu0 %v893
  %1104 = vmatpush.bf16.msra.mxu0 %v889
  %1105 = vmatpush.bf16.msra.mxu0 %v885
  %1106 = vmatpush.bf16.msra.mxu0 %v881
  %1107 = vmatpush.bf16.msra.mxu0 %v877
  %1108 = vmatpush.bf16.msra.mxu0 %v873
  %1109 = vmatpush.bf16.msra.mxu0 %v869
  %1110 = vmatpush.bf16.msra.mxu0 %v865
  %1111 = vmatmul.bf16.gmra.mxu0 %v308
  %v1112 = vpop.f32.mrf.mxu0
  %v1113 = vadd.f32 %v1099, %v1112
  %v1114 = vpop.f32.mrf.mxu0
  %v1115 = vadd.f32 %v1101, %v1114
  %1116 = vdwg.mxu0
  %1117 = vmatpush.bf16.msra.mxu0 %v925
  %1118 = vmatpush.bf16.msra.mxu0 %v921
  %1119 = vmatpush.bf16.msra.mxu0 %v917
  %1120 = vmatpush.bf16.msra.mxu0 %v913
  %1121 = vmatpush.bf16.msra.mxu0 %v909
  %1122 = vmatpush.bf16.msra.mxu0 %v905
  %1123 = vmatpush.bf16.msra.mxu0 %v901
  %1124 = vmatpush.bf16.msra.mxu0 %v897
  %1125 = vmatmul.bf16.gmra.mxu0 %v309
  %v1126 = vpop.f32.mrf.mxu0
  %v1127 = vadd.f32 %v1113, %v1126
  %v1128 = vpop.f32.mrf.mxu0
  %v1129 = vadd.f32 %v1115, %v1128
  %1130 = vdwg.mxu0
  %1131 = vmatpush.bf16.msra.mxu0 %v957
  %1132 = vmatpush.bf16.msra.mxu0 %v953
  %1133 = vmatpush.bf16.msra.mxu0 %v949
  %1134 = vmatpush.bf16.msra.mxu0 %v945
  %1135 = vmatpush.bf16.msra.mxu0 %v941
  %1136 = vmatpush.bf16.msra.mxu0 %v937
  %1137 = vmatpush.bf16.msra.mxu0 %v933
  %1138 = vmatpush.bf16.msra.mxu0 %v929
  %1139 = vmatmul.bf16.gmra.mxu0 %v310
  %v1140 = vpop.f32.mrf.mxu0
  %v1141 = vadd.f32 %v1127, %v1140
  %v1142 = vpop.f32.mrf.mxu0
  %v1143 = vadd.f32 %v1129, %v1142
  %1144 = vdwg.mxu0
  %1145 = vmatpush.bf16.msra.mxu0 %v862
  %1146 = vmatpush.bf16.msra.mxu0 %v858
  %1147 = vmatpush.bf16.msra.mxu0 %v854
  %1148 = vmatpush.bf16.msra.mxu0 %v850
  %1149 = vmatpush.bf16.msra.mxu0 %v846
  %1150 = vmatpush.bf16.msra.mxu0 %v842
  %1151 = vmatpush.bf16.msra.mxu0 %v838
  %1152 = vmatpush.bf16.msra.mxu0 %v834
  %1153 = vmatmul.bf16.gmra.mxu0 %v307
  %v1154 = vpop.f32.mrf.mxu0
  %v1155 = vadd.f32 %v442, %v1154
  %v1156 = vpop.f32.mrf.mxu0
  %v1157 = vadd.f32 %v442, %v1156
  %1158 = vdwg.mxu0
  %1159 = vmatpush.bf16.msra.mxu0 %v894
  %1160 = vmatpush.bf16.msra.mxu0 %v890
  %1161 = vmatpush.bf16.msra.mxu0 %v886
  %1162 = vmatpush.bf16.msra.mxu0 %v882
  %1163 = vmatpush.bf16.msra.mxu0 %v878
  %1164 = vmatpush.bf16.msra.mxu0 %v874
  %1165 = vmatpush.bf16.msra.mxu0 %v870
  %1166 = vmatpush.bf16.msra.mxu0 %v866
  %1167 = vmatmul.bf16.gmra.mxu0 %v308
  %v1168 = vpop.f32.mrf.mxu0
  %v1169 = vadd.f32 %v1155, %v1168
  %v1170 = vpop.f32.mrf.mxu0
  %v1171 = vadd.f32 %v1157, %v1170
  %1172 = vdwg.mxu0
  %1173 = vmatpush.bf16.msra.mxu0 %v926
  %1174 = vmatpush.bf16.msra.mxu0 %v922
  %1175 = vmatpush.bf16.msra.mxu0 %v918
  %1176 = vmatpush.bf16.msra.mxu0 %v914
  %1177 = vmatpush.bf16.msra.mxu0 %v910
  %1178 = vmatpush.bf16.msra.mxu0 %v906
  %1179 = vmatpush.bf16.msra.mxu0 %v902
  %1180 = vmatpush.bf16.msra.mxu0 %v898
  %1181 = vmatmul.bf16.gmra.mxu0 %v309
  %v1182 = vpop.f32.mrf.mxu0
  %v1183 = vadd.f32 %v1169, %v1182
  %v1184 = vpop.f32.mrf.mxu0
  %v1185 = vadd.f32 %v1171, %v1184
  %1186 = vdwg.mxu0
  %1187 = vmatpush.bf16.msra.mxu0 %v958
  %1188 = vmatpush.bf16.msra.mxu0 %v954
  %1189 = vmatpush.bf16.msra.mxu0 %v950
  %1190 = vmatpush.bf16.msra.mxu0 %v946
  %1191 = vmatpush.bf16.msra.mxu0 %v942
  %1192 = vmatpush.bf16.msra.mxu0 %v938
  %1193 = vmatpush.bf16.msra.mxu0 %v934
  %1194 = vmatpush.bf16.msra.mxu0 %v930
  %1195 = vmatmul.bf16.gmra.mxu0 %v310
  %v1196 = vpop.f32.mrf.mxu0
  %v1197 = vadd.f32 %v1183, %v1196
  %v1198 = vpop.f32.mrf.mxu0
  %v1199 = vadd.f32 %v1185, %v1198
  %1200 = vdwg.mxu0
  %1201 = vmatpush.bf16.msra.mxu0 %v863
  %1202 = vmatpush.bf16.msra.mxu0 %v859
  %1203 = vmatpush.bf16.msra.mxu0 %v855
  %1204 = vmatpush.bf16.msra.mxu0 %v851
  %1205 = vmatpush.bf16.msra.mxu0 %v847
  %1206 = vmatpush.bf16.msra.mxu0 %v843
  %1207 = vmatpush.bf16.msra.mxu0 %v839
  %1208 = vmatpush.bf16.msra.mxu0 %v835
  %1209 = vmatmul.bf16.gmra.mxu0 %v307
  %v1210 = vpop.f32.mrf.mxu0
  %v1211 = vadd.f32 %v443, %v1210
  %v1212 = vpop.f32.mrf.mxu0
  %v1213 = vadd.f32 %v443, %v1212
  %1214 = vdwg.mxu0
  %1215 = vmatpush.bf16.msra.mxu0 %v895
  %1216 = vmatpush.bf16.msra.mxu0 %v891
  %1217 = vmatpush.bf16.msra.mxu0 %v887
  %1218 = vmatpush.bf16.msra.mxu0 %v883
  %1219 = vmatpush.bf16.msra.mxu0 %v879
  %1220 = vmatpush.bf16.msra.mxu0 %v875
  %1221 = vmatpush.bf16.msra.mxu0 %v871
  %1222 = vmatpush.bf16.msra.mxu0 %v867
  %1223 = vmatmul.bf16.gmra.mxu0 %v308
  %v1224 = vpop.f32.mrf.mxu0
  %v1225 = vadd.f32 %v1211, %v1224
  %v1226 = vpop.f32.mrf.mxu0
  %v1227 = vadd.f32 %v1213, %v1226
  %1228 = vdwg.mxu0
  %1229 = vmatpush.bf16.msra.mxu0 %v927
  %1230 = vmatpush.bf16.msra.mxu0 %v923
  %1231 = vmatpush.bf16.msra.mxu0 %v919
  %1232 = vmatpush.bf16.msra.mxu0 %v915
  %1233 = vmatpush.bf16.msra.mxu0 %v911
  %1234 = vmatpush.bf16.msra.mxu0 %v907
  %1235 = vmatpush.bf16.msra.mxu0 %v903
  %1236 = vmatpush.bf16.msra.mxu0 %v899
  %1237 = vmatmul.bf16.gmra.mxu0 %v309
  %v1238 = vpop.f32.mrf.mxu0
  %v1239 = vadd.f32 %v1225, %v1238
  %v1240 = vpop.f32.mrf.mxu0
  %v1241 = vadd.f32 %v1227, %v1240
  %1242 = vdwg.mxu0
  %1243 = vmatpush.bf16.msra.mxu0 %v959
  %1244 = vmatpush.bf16.msra.mxu0 %v955
  %1245 = vmatpush.bf16.msra.mxu0 %v951
  %1246 = vmatpush.bf16.msra.mxu0 %v947
  %1247 = vmatpush.bf16.msra.mxu0 %v943
  %1248 = vmatpush.bf16.msra.mxu0 %v939
  %1249 = vmatpush.bf16.msra.mxu0 %v935
  %1250 = vmatpush.bf16.msra.mxu0 %v931
  %1251 = vmatmul.bf16.gmra.mxu0 %v310
  %v1252 = vpop.f32.mrf.mxu0
  %v1253 = vadd.f32 %v1239, %v1252
  %v1254 = vpop.f32.mrf.mxu0
  %v1255 = vadd.f32 %v1241, %v1254
  %1256 = vdwg.mxu0
  %1257 = vmatpush.bf16.msra.mxu0 %v864
  %1258 = vmatpush.bf16.msra.mxu0 %v860
  %1259 = vmatpush.bf16.msra.mxu0 %v856
  %1260 = vmatpush.bf16.msra.mxu0 %v852
  %1261 = vmatpush.bf16.msra.mxu0 %v848
  %1262 = vmatpush.bf16.msra.mxu0 %v844
  %1263 = vmatpush.bf16.msra.mxu0 %v840
  %1264 = vmatpush.bf16.msra.mxu0 %v836
  %1265 = vmatmul.bf16.gmra.mxu0 %v307
  %v1266 = vpop.f32.mrf.mxu0
  %v1267 = vadd.f32 %v444, %v1266
  %v1268 = vpop.f32.mrf.mxu0
  %v1269 = vadd.f32 %v444, %v1268
  %1270 = vdwg.mxu0
  %1271 = vmatpush.bf16.msra.mxu0 %v896
  %1272 = vmatpush.bf16.msra.mxu0 %v892
  %1273 = vmatpush.bf16.msra.mxu0 %v888
  %1274 = vmatpush.bf16.msra.mxu0 %v884
  %1275 = vmatpush.bf16.msra.mxu0 %v880
  %1276 = vmatpush.bf16.msra.mxu0 %v876
  %1277 = vmatpush.bf16.msra.mxu0 %v872
  %1278 = vmatpush.bf16.msra.mxu0 %v868
  %1279 = vmatmul.bf16.gmra.mxu0 %v308
  %v1280 = vpop.f32.mrf.mxu0
  %v1281 = vadd.f32 %v1267, %v1280
  %v1282 = vpop.f32.mrf.mxu0
  %v1283 = vadd.f32 %v1269, %v1282
  %1284 = vdwg.mxu0
  %1285 = vmatpush.bf16.msra.mxu0 %v928
  %1286 = vmatpush.bf16.msra.mxu0 %v924
  %1287 = vmatpush.bf16.msra.mxu0 %v920
  %1288 = vmatpush.bf16.msra.mxu0 %v916
  %1289 = vmatpush.bf16.msra.mxu0 %v912
  %1290 = vmatpush.bf16.msra.mxu0 %v908
  %1291 = vmatpush.bf16.msra.mxu0 %v904
  %1292 = vmatpush.bf16.msra.mxu0 %v900
  %1293 = vmatmul.bf16.gmra.mxu0 %v309
  %v1294 = vpop.f32.mrf.mxu0
  %v1295 = vadd.f32 %v1281, %v1294
  %v1296 = vpop.f32.mrf.mxu0
  %v1297 = vadd.f32 %v1283, %v1296
  %1298 = vdwg.mxu0
  %1299 = vmatpush.bf16.msra.mxu0 %v960
  %1300 = vmatpush.bf16.msra.mxu0 %v956
  %1301 = vmatpush.bf16.msra.mxu0 %v952
  %1302 = vmatpush.bf16.msra.mxu0 %v948
  %1303 = vmatpush.bf16.msra.mxu0 %v944
  %1304 = vmatpush.bf16.msra.mxu0 %v940
  %1305 = vmatpush.bf16.msra.mxu0 %v936
  %1306 = vmatpush.bf16.msra.mxu0 %v932
  %1307 = vmatmul.bf16.gmra.mxu0 %v310
  %v1308 = vpop.f32.mrf.mxu0
  %v1309 = vadd.f32 %v1295, %v1308
  %v1310 = vpop.f32.mrf.mxu0
  %v1311 = vadd.f32 %v1297, %v1310
  %1312 = vdwg.mxu0
  %v1313 = vmax.f32 %v1141, 0.0
  %v1314 = vmax.f32 %v1197, 0.0
  %v1315 = vmax.f32 %v1253, 0.0
  %v1316 = vmax.f32 %v1309, 0.0
  %v1317 = vmax.f32 %v1143, 0.0
  %v1318 = vmax.f32 %v1199, 0.0
  %v1319 = vmax.f32 %v1255, 0.0
  %v1320 = vmax.f32 %v1311, 0.0
  %v1321 = vpack.c.bf16 %v1317, %v1313
  %v1322 = vpack.c.bf16 %v1318, %v1314
  %v1323 = vpack.c.bf16 %v1319, %v1315
  %v1324 = vpack.c.bf16 %v1320, %v1316
  %v1325 = vld [vmem:[%s5] sm:$0xff]
  %v1326 = vld [vmem:[%s5 + $0x8] sm:$0xff]
  %v1327 = vld [vmem:[%s5 + $0x10] sm:$0xff]
  %v1328 = vld [vmem:[%s5 + $0x18] sm:$0xff]
  %v1329 = vld [vmem:[%s5 + $0x20] sm:$0xff]
  %v1330 = vld [vmem:[%s5 + $0x28] sm:$0xff]
  %v1331 = vld [vmem:[%s5 + $0x30] sm:$0xff]
  %v1332 = vld [vmem:[%s5 + $0x38] sm:$0xff]
  %v1333 = vld [vmem:[%s5 + $0x40] sm:$0xff]
  %v1334 = vld [vmem:[%s5 + $0x48] sm:$0xff]
  %v1335 = vld [vmem:[%s5 + $0x50] sm:$0xff]
  %v1336 = vld [vmem:[%s5 + $0x58] sm:$0xff]
  %v1337 = vld [vmem:[%s5 + $0x60] sm:$0xff]
  %v1338 = vld [vmem:[%s5 + $0x68] sm:$0xff]
  %v1339 = vld [vmem:[%s5 + $0x70] sm:$0xff]
  %v1340 = vld [vmem:[%s5 + $0x78] sm:$0xff]
  %v1341 = vld [vmem:[%s5 + $0x80] sm:$0xff]
  %v1342 = vld [vmem:[%s5 + $0x88] sm:$0xff]
  %v1343 = vld [vmem:[%s5 + $0x90] sm:$0xff]
  %v1344 = vld [vmem:[%s5 + $0x98] sm:$0xff]
  %v1345 = vld [vmem:[%s5 + $0xa0] sm:$0xff]
  %v1346 = vld [vmem:[%s5 + $0xa8] sm:$0xff]
  %v1347 = vld [vmem:[%s5 + $0xb0] sm:$0xff]
  %v1348 = vld [vmem:[%s5 + $0xb8] sm:$0xff]
  %v1349 = vld [vmem:[%s5 + $0xc0] sm:$0xff]
  %v1350 = vld [vmem:[%s5 + $0xc8] sm:$0xff]
  %v1351 = vld [vmem:[%s5 + $0xd0] sm:$0xff]
  %v1352 = vld [vmem:[%s5 + $0xd8] sm:$0xff]
  %v1353 = vld [vmem:[%s5 + $0xe0] sm:$0xff]
  %v1354 = vld [vmem:[%s5 + $0xe8] sm:$0xff]
  %v1355 = vld [vmem:[%s5 + $0xf0] sm:$0xff]
  %v1356 = vld [vmem:[%s5 + $0xf8] sm:$0xff]
  %v1357 = vld [vmem:[%s5 + $0x100] sm:$0xff]
  %v1358 = vld [vmem:[%s5 + $0x108] sm:$0xff]
  %v1359 = vld [vmem:[%s5 + $0x110] sm:$0xff]
  %v1360 = vld [vmem:[%s5 + $0x118] sm:$0xff]
  %v1361 = vld [vmem:[%s5 + $0x120] sm:$0xff]
  %v1362 = vld [vmem:[%s5 + $0x128] sm:$0xff]
  %v1363 = vld [vmem:[%s5 + $0x130] sm:$0xff]
  %v1364 = vld [vmem:[%s5 + $0x138] sm:$0xff]
  %v1365 = vld [vmem:[%s5 + $0x140] sm:$0xff]
  %v1366 = vld [vmem:[%s5 + $0x148] sm:$0xff]
  %v1367 = vld [vmem:[%s5 + $0x150] sm:$0xff]
  %v1368 = vld [vmem:[%s5 + $0x158] sm:$0xff]
  %v1369 = vld [vmem:[%s5 + $0x160] sm:$0xff]
  %v1370 = vld [vmem:[%s5 + $0x168] sm:$0xff]
  %v1371 = vld [vmem:[%s5 + $0x170] sm:$0xff]
  %v1372 = vld [vmem:[%s5 + $0x178] sm:$0xff]
  %v1373 = vld [vmem:[%s5 + $0x180] sm:$0xff]
  %v1374 = vld [vmem:[%s5 + $0x188] sm:$0xff]
  %v1375 = vld [vmem:[%s5 + $0x190] sm:$0xff]
  %v1376 = vld [vmem:[%s5 + $0x198] sm:$0xff]
  %v1377 = vld [vmem:[%s5 + $0x1a0] sm:$0xff]
  %v1378 = vld [vmem:[%s5 + $0x1a8] sm:$0xff]
  %v1379 = vld [vmem:[%s5 + $0x1b0] sm:$0xff]
  %v1380 = vld [vmem:[%s5 + $0x1b8] sm:$0xff]
  %v1381 = vld [vmem:[%s5 + $0x1c0] sm:$0xff]
  %v1382 = vld [vmem:[%s5 + $0x1c8] sm:$0xff]
  %v1383 = vld [vmem:[%s5 + $0x1d0] sm:$0xff]
  %v1384 = vld [vmem:[%s5 + $0x1d8] sm:$0xff]
  %v1385 = vld [vmem:[%s5 + $0x1e0] sm:$0xff]
  %v1386 = vld [vmem:[%s5 + $0x1e8] sm:$0xff]
  %v1387 = vld [vmem:[%s5 + $0x1f0] sm:$0xff]
  %v1388 = vld [vmem:[%s5 + $0x1f8] sm:$0xff]
  %v1389 = vld [vmem:[%s5 + $0x200] sm:$0xff]
  %v1390 = vld [vmem:[%s5 + $0x208] sm:$0xff]
  %v1391 = vld [vmem:[%s5 + $0x210] sm:$0xff]
  %v1392 = vld [vmem:[%s5 + $0x218] sm:$0xff]
  %v1393 = vld [vmem:[%s5 + $0x220] sm:$0xff]
  %v1394 = vld [vmem:[%s5 + $0x228] sm:$0xff]
  %v1395 = vld [vmem:[%s5 + $0x230] sm:$0xff]
  %v1396 = vld [vmem:[%s5 + $0x238] sm:$0xff]
  %v1397 = vld [vmem:[%s5 + $0x240] sm:$0xff]
  %v1398 = vld [vmem:[%s5 + $0x248] sm:$0xff]
  %v1399 = vld [vmem:[%s5 + $0x250] sm:$0xff]
  %v1400 = vld [vmem:[%s5 + $0x258] sm:$0xff]
  %v1401 = vld [vmem:[%s5 + $0x260] sm:$0xff]
  %v1402 = vld [vmem:[%s5 + $0x268] sm:$0xff]
  %v1403 = vld [vmem:[%s5 + $0x270] sm:$0xff]
  %v1404 = vld [vmem:[%s5 + $0x278] sm:$0xff]
  %v1405 = vld [vmem:[%s5 + $0x280] sm:$0xff]
  %v1406 = vld [vmem:[%s5 + $0x288] sm:$0xff]
  %v1407 = vld [vmem:[%s5 + $0x290] sm:$0xff]
  %v1408 = vld [vmem:[%s5 + $0x298] sm:$0xff]
  %v1409 = vld [vmem:[%s5 + $0x2a0] sm:$0xff]
  %v1410 = vld [vmem:[%s5 + $0x2a8] sm:$0xff]
  %v1411 = vld [vmem:[%s5 + $0x2b0] sm:$0xff]
  %v1412 = vld [vmem:[%s5 + $0x2b8] sm:$0xff]
  %v1413 = vld [vmem:[%s5 + $0x2c0] sm:$0xff]
  %v1414 = vld [vmem:[%s5 + $0x2c8] sm:$0xff]
  %v1415 = vld [vmem:[%s5 + $0x2d0] sm:$0xff]
  %v1416 = vld [vmem:[%s5 + $0x2d8] sm:$0xff]
  %v1417 = vld [vmem:[%s5 + $0x2e0] sm:$0xff]
  %v1418 = vld [vmem:[%s5 + $0x2e8] sm:$0xff]
  %v1419 = vld [vmem:[%s5 + $0x2f0] sm:$0xff]
  %v1420 = vld [vmem:[%s5 + $0x2f8] sm:$0xff]
  %v1421 = vld [vmem:[%s5 + $0x300] sm:$0xff]
  %v1422 = vld [vmem:[%s5 + $0x308] sm:$0xff]
  %v1423 = vld [vmem:[%s5 + $0x310] sm:$0xff]
  %v1424 = vld [vmem:[%s5 + $0x318] sm:$0xff]
  %v1425 = vld [vmem:[%s5 + $0x320] sm:$0xff]
  %v1426 = vld [vmem:[%s5 + $0x328] sm:$0xff]
  %v1427 = vld [vmem:[%s5 + $0x330] sm:$0xff]
  %v1428 = vld [vmem:[%s5 + $0x338] sm:$0xff]
  %v1429 = vld [vmem:[%s5 + $0x340] sm:$0xff]
  %v1430 = vld [vmem:[%s5 + $0x348] sm:$0xff]
  %v1431 = vld [vmem:[%s5 + $0x350] sm:$0xff]
  %v1432 = vld [vmem:[%s5 + $0x358] sm:$0xff]
  %v1433 = vld [vmem:[%s5 + $0x360] sm:$0xff]
  %v1434 = vld [vmem:[%s5 + $0x368] sm:$0xff]
  %v1435 = vld [vmem:[%s5 + $0x370] sm:$0xff]
  %v1436 = vld [vmem:[%s5 + $0x378] sm:$0xff]
  %v1437 = vld [vmem:[%s5 + $0x380] sm:$0xff]
  %v1438 = vld [vmem:[%s5 + $0x388] sm:$0xff]
  %v1439 = vld [vmem:[%s5 + $0x390] sm:$0xff]
  %v1440 = vld [vmem:[%s5 + $0x398] sm:$0xff]
  %v1441 = vld [vmem:[%s5 + $0x3a0] sm:$0xff]
  %v1442 = vld [vmem:[%s5 + $0x3a8] sm:$0xff]
  %v1443 = vld [vmem:[%s5 + $0x3b0] sm:$0xff]
  %v1444 = vld [vmem:[%s5 + $0x3b8] sm:$0xff]
  %v1445 = vld [vmem:[%s5 + $0x3c0] sm:$0xff]
  %v1446 = vld [vmem:[%s5 + $0x3c8] sm:$0xff]
  %v1447 = vld [vmem:[%s5 + $0x3d0] sm:$0xff]
  %v1448 = vld [vmem:[%s5 + $0x3d8] sm:$0xff]
  %v1449 = vld [vmem:[%s5 + $0x3e0] sm:$0xff]
  %v1450 = vld [vmem:[%s5 + $0x3e8] sm:$0xff]
  %v1451 = vld [vmem:[%s5 + $0x3f0] sm:$0xff]
  %v1452 = vld [vmem:[%s5 + $0x3f8] sm:$0xff]
  %v1453 = vld [vmem:[%s6] sm:$0xf]
  %v1455 = vperm.slane %v1453, 0
  %v1456 = vperm.slane %v1453, 1
  %v1457 = vperm.slane %v1453, 2
  %v1458 = vperm.slane %v1453, 3
  %v1591 = vunpack.c.l.b16 %v1325
  %v1592 = vunpack.c.h.b16 %v1325
  %v1593 = vunpack.c.l.b16 %v1326
  %v1594 = vunpack.c.h.b16 %v1326
  %v1595 = vunpack.c.l.b16 %v1327
  %v1596 = vunpack.c.h.b16 %v1327
  %v1597 = vunpack.c.l.b16 %v1328
  %v1598 = vunpack.c.h.b16 %v1328
  %v1599 = vunpack.c.l.b16 %v1329
  %v1600 = vunpack.c.h.b16 %v1329
  %v1601 = vunpack.c.l.b16 %v1330
  %v1602 = vunpack.c.h.b16 %v1330
  %v1603 = vunpack.c.l.b16 %v1331
  %v1604 = vunpack.c.h.b16 %v1331
  %v1605 = vunpack.c.l.b16 %v1332
  %v1606 = vunpack.c.h.b16 %v1332
  %v1607 = vunpack.c.l.b16 %v1333
  %v1608 = vunpack.c.h.b16 %v1333
  %v1609 = vunpack.c.l.b16 %v1334
  %v1610 = vunpack.c.h.b16 %v1334
  %v1611 = vunpack.c.l.b16 %v1335
  %v1612 = vunpack.c.h.b16 %v1335
  %v1613 = vunpack.c.l.b16 %v1336
  %v1614 = vunpack.c.h.b16 %v1336
  %v1615 = vunpack.c.l.b16 %v1337
  %v1616 = vunpack.c.h.b16 %v1337
  %v1617 = vunpack.c.l.b16 %v1338
  %v1618 = vunpack.c.h.b16 %v1338
  %v1619 = vunpack.c.l.b16 %v1339
  %v1620 = vunpack.c.h.b16 %v1339
  %v1621 = vunpack.c.l.b16 %v1340
  %v1622 = vunpack.c.h.b16 %v1340
  %v1623 = vunpack.c.l.b16 %v1341
  %v1624 = vunpack.c.h.b16 %v1341
  %v1625 = vunpack.c.l.b16 %v1342
  %v1626 = vunpack.c.h.b16 %v1342
  %v1627 = vunpack.c.l.b16 %v1343
  %v1628 = vunpack.c.h.b16 %v1343
  %v1629 = vunpack.c.l.b16 %v1344
  %v1630 = vunpack.c.h.b16 %v1344
  %v1631 = vunpack.c.l.b16 %v1345
  %v1632 = vunpack.c.h.b16 %v1345
  %v1633 = vunpack.c.l.b16 %v1346
  %v1634 = vunpack.c.h.b16 %v1346
  %v1635 = vunpack.c.l.b16 %v1347
  %v1636 = vunpack.c.h.b16 %v1347
  %v1637 = vunpack.c.l.b16 %v1348
  %v1638 = vunpack.c.h.b16 %v1348
  %v1639 = vunpack.c.l.b16 %v1349
  %v1640 = vunpack.c.h.b16 %v1349
  %v1641 = vunpack.c.l.b16 %v1350
  %v1642 = vunpack.c.h.b16 %v1350
  %v1643 = vunpack.c.l.b16 %v1351
  %v1644 = vunpack.c.h.b16 %v1351
  %v1645 = vunpack.c.l.b16 %v1352
  %v1646 = vunpack.c.h.b16 %v1352
  %v1647 = vunpack.c.l.b16 %v1353
  %v1648 = vunpack.c.h.b16 %v1353
  %v1649 = vunpack.c.l.b16 %v1354
  %v1650 = vunpack.c.h.b16 %v1354
  %v1651 = vunpack.c.l.b16 %v1355
  %v1652 = vunpack.c.h.b16 %v1355
  %v1653 = vunpack.c.l.b16 %v1356
  %v1654 = vunpack.c.h.b16 %v1356
  %v1655 = vunpack.c.l.b16 %v1357
  %v1656 = vunpack.c.h.b16 %v1357
  %v1657 = vunpack.c.l.b16 %v1358
  %v1658 = vunpack.c.h.b16 %v1358
  %v1659 = vunpack.c.l.b16 %v1359
  %v1660 = vunpack.c.h.b16 %v1359
  %v1661 = vunpack.c.l.b16 %v1360
  %v1662 = vunpack.c.h.b16 %v1360
  %v1663 = vunpack.c.l.b16 %v1361
  %v1664 = vunpack.c.h.b16 %v1361
  %v1665 = vunpack.c.l.b16 %v1362
  %v1666 = vunpack.c.h.b16 %v1362
  %v1667 = vunpack.c.l.b16 %v1363
  %v1668 = vunpack.c.h.b16 %v1363
  %v1669 = vunpack.c.l.b16 %v1364
  %v1670 = vunpack.c.h.b16 %v1364
  %v1671 = vunpack.c.l.b16 %v1365
  %v1672 = vunpack.c.h.b16 %v1365
  %v1673 = vunpack.c.l.b16 %v1366
  %v1674 = vunpack.c.h.b16 %v1366
  %v1675 = vunpack.c.l.b16 %v1367
  %v1676 = vunpack.c.h.b16 %v1367
  %v1677 = vunpack.c.l.b16 %v1368
  %v1678 = vunpack.c.h.b16 %v1368
  %v1679 = vunpack.c.l.b16 %v1369
  %v1680 = vunpack.c.h.b16 %v1369
  %v1681 = vunpack.c.l.b16 %v1370
  %v1682 = vunpack.c.h.b16 %v1370
  %v1683 = vunpack.c.l.b16 %v1371
  %v1684 = vunpack.c.h.b16 %v1371
  %v1685 = vunpack.c.l.b16 %v1372
  %v1686 = vunpack.c.h.b16 %v1372
  %v1687 = vunpack.c.l.b16 %v1373
  %v1688 = vunpack.c.h.b16 %v1373
  %v1689 = vunpack.c.l.b16 %v1374
  %v1690 = vunpack.c.h.b16 %v1374
  %v1691 = vunpack.c.l.b16 %v1375
  %v1692 = vunpack.c.h.b16 %v1375
  %v1693 = vunpack.c.l.b16 %v1376
  %v1694 = vunpack.c.h.b16 %v1376
  %v1695 = vunpack.c.l.b16 %v1377
  %v1696 = vunpack.c.h.b16 %v1377
  %v1697 = vunpack.c.l.b16 %v1378
  %v1698 = vunpack.c.h.b16 %v1378
  %v1699 = vunpack.c.l.b16 %v1379
  %v1700 = vunpack.c.h.b16 %v1379
  %v1701 = vunpack.c.l.b16 %v1380
  %v1702 = vunpack.c.h.b16 %v1380
  %v1703 = vunpack.c.l.b16 %v1381
  %v1704 = vunpack.c.h.b16 %v1381
  %v1705 = vunpack.c.l.b16 %v1382
  %v1706 = vunpack.c.h.b16 %v1382
  %v1707 = vunpack.c.l.b16 %v1383
  %v1708 = vunpack.c.h.b16 %v1383
  %v1709 = vunpack.c.l.b16 %v1384
  %v1710 = vunpack.c.h.b16 %v1384
  %v1711 = vunpack.c.l.b16 %v1385
  %v1712 = vunpack.c.h.b16 %v1385
  %v1713 = vunpack.c.l.b16 %v1386
  %v1714 = vunpack.c.h.b16 %v1386
  %v1715 = vunpack.c.l.b16 %v1387
  %v1716 = vunpack.c.h.b16 %v1387
  %v1717 = vunpack.c.l.b16 %v1388
  %v1718 = vunpack.c.h.b16 %v1388
  %v1719 = vunpack.c.l.b16 %v1389
  %v1720 = vunpack.c.h.b16 %v1389
  %v1721 = vunpack.c.l.b16 %v1390
  %v1722 = vunpack.c.h.b16 %v1390
  %v1723 = vunpack.c.l.b16 %v1391
  %v1724 = vunpack.c.h.b16 %v1391
  %v1725 = vunpack.c.l.b16 %v1392
  %v1726 = vunpack.c.h.b16 %v1392
  %v1727 = vunpack.c.l.b16 %v1393
  %v1728 = vunpack.c.h.b16 %v1393
  %v1729 = vunpack.c.l.b16 %v1394
  %v1730 = vunpack.c.h.b16 %v1394
  %v1731 = vunpack.c.l.b16 %v1395
  %v1732 = vunpack.c.h.b16 %v1395
  %v1733 = vunpack.c.l.b16 %v1396
  %v1734 = vunpack.c.h.b16 %v1396
  %v1735 = vunpack.c.l.b16 %v1397
  %v1736 = vunpack.c.h.b16 %v1397
  %v1737 = vunpack.c.l.b16 %v1398
  %v1738 = vunpack.c.h.b16 %v1398
  %v1739 = vunpack.c.l.b16 %v1399
  %v1740 = vunpack.c.h.b16 %v1399
  %v1741 = vunpack.c.l.b16 %v1400
  %v1742 = vunpack.c.h.b16 %v1400
  %v1743 = vunpack.c.l.b16 %v1401
  %v1744 = vunpack.c.h.b16 %v1401
  %v1745 = vunpack.c.l.b16 %v1402
  %v1746 = vunpack.c.h.b16 %v1402
  %v1747 = vunpack.c.l.b16 %v1403
  %v1748 = vunpack.c.h.b16 %v1403
  %v1749 = vunpack.c.l.b16 %v1404
  %v1750 = vunpack.c.h.b16 %v1404
  %v1751 = vunpack.c.l.b16 %v1405
  %v1752 = vunpack.c.h.b16 %v1405
  %v1753 = vunpack.c.l.b16 %v1406
  %v1754 = vunpack.c.h.b16 %v1406
  %v1755 = vunpack.c.l.b16 %v1407
  %v1756 = vunpack.c.h.b16 %v1407
  %v1757 = vunpack.c.l.b16 %v1408
  %v1758 = vunpack.c.h.b16 %v1408
  %v1759 = vunpack.c.l.b16 %v1409
  %v1760 = vunpack.c.h.b16 %v1409
  %v1761 = vunpack.c.l.b16 %v1410
  %v1762 = vunpack.c.h.b16 %v1410
  %v1763 = vunpack.c.l.b16 %v1411
  %v1764 = vunpack.c.h.b16 %v1411
  %v1765 = vunpack.c.l.b16 %v1412
  %v1766 = vunpack.c.h.b16 %v1412
  %v1767 = vunpack.c.l.b16 %v1413
  %v1768 = vunpack.c.h.b16 %v1413
  %v1769 = vunpack.c.l.b16 %v1414
  %v1770 = vunpack.c.h.b16 %v1414
  %v1771 = vunpack.c.l.b16 %v1415
  %v1772 = vunpack.c.h.b16 %v1415
  %v1773 = vunpack.c.l.b16 %v1416
  %v1774 = vunpack.c.h.b16 %v1416
  %v1775 = vunpack.c.l.b16 %v1417
  %v1776 = vunpack.c.h.b16 %v1417
  %v1777 = vunpack.c.l.b16 %v1418
  %v1778 = vunpack.c.h.b16 %v1418
  %v1779 = vunpack.c.l.b16 %v1419
  %v1780 = vunpack.c.h.b16 %v1419
  %v1781 = vunpack.c.l.b16 %v1420
  %v1782 = vunpack.c.h.b16 %v1420
  %v1783 = vunpack.c.l.b16 %v1421
  %v1784 = vunpack.c.h.b16 %v1421
  %v1785 = vunpack.c.l.b16 %v1422
  %v1786 = vunpack.c.h.b16 %v1422
  %v1787 = vunpack.c.l.b16 %v1423
  %v1788 = vunpack.c.h.b16 %v1423
  %v1789 = vunpack.c.l.b16 %v1424
  %v1790 = vunpack.c.h.b16 %v1424
  %v1791 = vunpack.c.l.b16 %v1425
  %v1792 = vunpack.c.h.b16 %v1425
  %v1793 = vunpack.c.l.b16 %v1426
  %v1794 = vunpack.c.h.b16 %v1426
  %v1795 = vunpack.c.l.b16 %v1427
  %v1796 = vunpack.c.h.b16 %v1427
  %v1797 = vunpack.c.l.b16 %v1428
  %v1798 = vunpack.c.h.b16 %v1428
  %v1799 = vunpack.c.l.b16 %v1429
  %v1800 = vunpack.c.h.b16 %v1429
  %v1801 = vunpack.c.l.b16 %v1430
  %v1802 = vunpack.c.h.b16 %v1430
  %v1803 = vunpack.c.l.b16 %v1431
  %v1804 = vunpack.c.h.b16 %v1431
  %v1805 = vunpack.c.l.b16 %v1432
  %v1806 = vunpack.c.h.b16 %v1432
  %v1807 = vunpack.c.l.b16 %v1433
  %v1808 = vunpack.c.h.b16 %v1433
  %v1809 = vunpack.c.l.b16 %v1434
  %v1810 = vunpack.c.h.b16 %v1434
  %v1811 = vunpack.c.l.b16 %v1435
  %v1812 = vunpack.c.h.b16 %v1435
  %v1813 = vunpack.c.l.b16 %v1436
  %v1814 = vunpack.c.h.b16 %v1436
  %v1815 = vunpack.c.l.b16 %v1437
  %v1816 = vunpack.c.h.b16 %v1437
  %v1817 = vunpack.c.l.b16 %v1438
  %v1818 = vunpack.c.h.b16 %v1438
  %v1819 = vunpack.c.l.b16 %v1439
  %v1820 = vunpack.c.h.b16 %v1439
  %v1821 = vunpack.c.l.b16 %v1440
  %v1822 = vunpack.c.h.b16 %v1440
  %v1823 = vunpack.c.l.b16 %v1441
  %v1824 = vunpack.c.h.b16 %v1441
  %v1825 = vunpack.c.l.b16 %v1442
  %v1826 = vunpack.c.h.b16 %v1442
  %v1827 = vunpack.c.l.b16 %v1443
  %v1828 = vunpack.c.h.b16 %v1443
  %v1829 = vunpack.c.l.b16 %v1444
  %v1830 = vunpack.c.h.b16 %v1444
  %v1831 = vunpack.c.l.b16 %v1445
  %v1832 = vunpack.c.h.b16 %v1445
  %v1833 = vunpack.c.l.b16 %v1446
  %v1834 = vunpack.c.h.b16 %v1446
  %v1835 = vunpack.c.l.b16 %v1447
  %v1836 = vunpack.c.h.b16 %v1447
  %v1837 = vunpack.c.l.b16 %v1448
  %v1838 = vunpack.c.h.b16 %v1448
  %v1839 = vunpack.c.l.b16 %v1449
  %v1840 = vunpack.c.h.b16 %v1449
  %v1841 = vunpack.c.l.b16 %v1450
  %v1842 = vunpack.c.h.b16 %v1450
  %v1843 = vunpack.c.l.b16 %v1451
  %v1844 = vunpack.c.h.b16 %v1451
  %v1845 = vunpack.c.l.b16 %v1452
  %v1846 = vunpack.c.h.b16 %v1452
  %v1847 = vpack.c.b16 %v1595, %v1591
  %v1848 = vpack.c.b16 %v1596, %v1592
  %v1849 = vpack.c.b16 %v1597, %v1593
  %v1850 = vpack.c.b16 %v1598, %v1594
  %v1851 = vpack.c.b16 %v1603, %v1599
  %v1852 = vpack.c.b16 %v1604, %v1600
  %v1853 = vpack.c.b16 %v1605, %v1601
  %v1854 = vpack.c.b16 %v1606, %v1602
  %v1855 = vpack.c.b16 %v1611, %v1607
  %v1856 = vpack.c.b16 %v1612, %v1608
  %v1857 = vpack.c.b16 %v1613, %v1609
  %v1858 = vpack.c.b16 %v1614, %v1610
  %v1859 = vpack.c.b16 %v1619, %v1615
  %v1860 = vpack.c.b16 %v1620, %v1616
  %v1861 = vpack.c.b16 %v1621, %v1617
  %v1862 = vpack.c.b16 %v1622, %v1618
  %v1863 = vpack.c.b16 %v1627, %v1623
  %v1864 = vpack.c.b16 %v1628, %v1624
  %v1865 = vpack.c.b16 %v1629, %v1625
  %v1866 = vpack.c.b16 %v1630, %v1626
  %v1867 = vpack.c.b16 %v1635, %v1631
  %v1868 = vpack.c.b16 %v1636, %v1632
  %v1869 = vpack.c.b16 %v1637, %v1633
  %v1870 = vpack.c.b16 %v1638, %v1634
  %v1871 = vpack.c.b16 %v1643, %v1639
  %v1872 = vpack.c.b16 %v1644, %v1640
  %v1873 = vpack.c.b16 %v1645, %v1641
  %v1874 = vpack.c.b16 %v1646, %v1642
  %v1875 = vpack.c.b16 %v1651, %v1647
  %v1876 = vpack.c.b16 %v1652, %v1648
  %v1877 = vpack.c.b16 %v1653, %v1649
  %v1878 = vpack.c.b16 %v1654, %v1650
  %v1879 = vpack.c.b16 %v1659, %v1655
  %v1880 = vpack.c.b16 %v1660, %v1656
  %v1881 = vpack.c.b16 %v1661, %v1657
  %v1882 = vpack.c.b16 %v1662, %v1658
  %v1883 = vpack.c.b16 %v1667, %v1663
  %v1884 = vpack.c.b16 %v1668, %v1664
  %v1885 = vpack.c.b16 %v1669, %v1665
  %v1886 = vpack.c.b16 %v1670, %v1666
  %v1887 = vpack.c.b16 %v1675, %v1671
  %v1888 = vpack.c.b16 %v1676, %v1672
  %v1889 = vpack.c.b16 %v1677, %v1673
  %v1890 = vpack.c.b16 %v1678, %v1674
  %v1891 = vpack.c.b16 %v1683, %v1679
  %v1892 = vpack.c.b16 %v1684, %v1680
  %v1893 = vpack.c.b16 %v1685, %v1681
  %v1894 = vpack.c.b16 %v1686, %v1682
  %v1895 = vpack.c.b16 %v1691, %v1687
  %v1896 = vpack.c.b16 %v1692, %v1688
  %v1897 = vpack.c.b16 %v1693, %v1689
  %v1898 = vpack.c.b16 %v1694, %v1690
  %v1899 = vpack.c.b16 %v1699, %v1695
  %v1900 = vpack.c.b16 %v1700, %v1696
  %v1901 = vpack.c.b16 %v1701, %v1697
  %v1902 = vpack.c.b16 %v1702, %v1698
  %v1903 = vpack.c.b16 %v1707, %v1703
  %v1904 = vpack.c.b16 %v1708, %v1704
  %v1905 = vpack.c.b16 %v1709, %v1705
  %v1906 = vpack.c.b16 %v1710, %v1706
  %v1907 = vpack.c.b16 %v1715, %v1711
  %v1908 = vpack.c.b16 %v1716, %v1712
  %v1909 = vpack.c.b16 %v1717, %v1713
  %v1910 = vpack.c.b16 %v1718, %v1714
  %v1911 = vpack.c.b16 %v1723, %v1719
  %v1912 = vpack.c.b16 %v1724, %v1720
  %v1913 = vpack.c.b16 %v1725, %v1721
  %v1914 = vpack.c.b16 %v1726, %v1722
  %v1915 = vpack.c.b16 %v1731, %v1727
  %v1916 = vpack.c.b16 %v1732, %v1728
  %v1917 = vpack.c.b16 %v1733, %v1729
  %v1918 = vpack.c.b16 %v1734, %v1730
  %v1919 = vpack.c.b16 %v1739, %v1735
  %v1920 = vpack.c.b16 %v1740, %v1736
  %v1921 = vpack.c.b16 %v1741, %v1737
  %v1922 = vpack.c.b16 %v1742, %v1738
  %v1923 = vpack.c.b16 %v1747, %v1743
  %v1924 = vpack.c.b16 %v1748, %v1744
  %v1925 = vpack.c.b16 %v1749, %v1745
  %v1926 = vpack.c.b16 %v1750, %v1746
  %v1927 = vpack.c.b16 %v1755, %v1751
  %v1928 = vpack.c.b16 %v1756, %v1752
  %v1929 = vpack.c.b16 %v1757, %v1753
  %v1930 = vpack.c.b16 %v1758, %v1754
  %v1931 = vpack.c.b16 %v1763, %v1759
  %v1932 = vpack.c.b16 %v1764, %v1760
  %v1933 = vpack.c.b16 %v1765, %v1761
  %v1934 = vpack.c.b16 %v1766, %v1762
  %v1935 = vpack.c.b16 %v1771, %v1767
  %v1936 = vpack.c.b16 %v1772, %v1768
  %v1937 = vpack.c.b16 %v1773, %v1769
  %v1938 = vpack.c.b16 %v1774, %v1770
  %v1939 = vpack.c.b16 %v1779, %v1775
  %v1940 = vpack.c.b16 %v1780, %v1776
  %v1941 = vpack.c.b16 %v1781, %v1777
  %v1942 = vpack.c.b16 %v1782, %v1778
  %v1943 = vpack.c.b16 %v1787, %v1783
  %v1944 = vpack.c.b16 %v1788, %v1784
  %v1945 = vpack.c.b16 %v1789, %v1785
  %v1946 = vpack.c.b16 %v1790, %v1786
  %v1947 = vpack.c.b16 %v1795, %v1791
  %v1948 = vpack.c.b16 %v1796, %v1792
  %v1949 = vpack.c.b16 %v1797, %v1793
  %v1950 = vpack.c.b16 %v1798, %v1794
  %v1951 = vpack.c.b16 %v1803, %v1799
  %v1952 = vpack.c.b16 %v1804, %v1800
  %v1953 = vpack.c.b16 %v1805, %v1801
  %v1954 = vpack.c.b16 %v1806, %v1802
  %v1955 = vpack.c.b16 %v1811, %v1807
  %v1956 = vpack.c.b16 %v1812, %v1808
  %v1957 = vpack.c.b16 %v1813, %v1809
  %v1958 = vpack.c.b16 %v1814, %v1810
  %v1959 = vpack.c.b16 %v1819, %v1815
  %v1960 = vpack.c.b16 %v1820, %v1816
  %v1961 = vpack.c.b16 %v1821, %v1817
  %v1962 = vpack.c.b16 %v1822, %v1818
  %v1963 = vpack.c.b16 %v1827, %v1823
  %v1964 = vpack.c.b16 %v1828, %v1824
  %v1965 = vpack.c.b16 %v1829, %v1825
  %v1966 = vpack.c.b16 %v1830, %v1826
  %v1967 = vpack.c.b16 %v1835, %v1831
  %v1968 = vpack.c.b16 %v1836, %v1832
  %v1969 = vpack.c.b16 %v1837, %v1833
  %v1970 = vpack.c.b16 %v1838, %v1834
  %v1971 = vpack.c.b16 %v1843, %v1839
  %v1972 = vpack.c.b16 %v1844, %v1840
  %v1973 = vpack.c.b16 %v1845, %v1841
  %v1974 = vpack.c.b16 %v1846, %v1842
  %2103 = vmatpush.bf16.msra.mxu0 %v1875
  %2104 = vmatpush.bf16.msra.mxu0 %v1871
  %2105 = vmatpush.bf16.msra.mxu0 %v1867
  %2106 = vmatpush.bf16.msra.mxu0 %v1863
  %2107 = vmatpush.bf16.msra.mxu0 %v1859
  %2108 = vmatpush.bf16.msra.mxu0 %v1855
  %2109 = vmatpush.bf16.msra.mxu0 %v1851
  %2110 = vmatpush.bf16.msra.mxu0 %v1847
  %2111 = vmatmul.bf16.gmra.mxu0 %v1321
  %v2112 = vpop.f32.mrf.mxu0
  %v2113 = vadd.f32 %v1455, %v2112
  %v2114 = vpop.f32.mrf.mxu0
  %v2115 = vadd.f32 %v1455, %v2114
  %2116 = vdwg.mxu0
  %2117 = vmatpush.bf16.msra.mxu0 %v1907
  %2118 = vmatpush.bf16.msra.mxu0 %v1903
  %2119 = vmatpush.bf16.msra.mxu0 %v1899
  %2120 = vmatpush.bf16.msra.mxu0 %v1895
  %2121 = vmatpush.bf16.msra.mxu0 %v1891
  %2122 = vmatpush.bf16.msra.mxu0 %v1887
  %2123 = vmatpush.bf16.msra.mxu0 %v1883
  %2124 = vmatpush.bf16.msra.mxu0 %v1879
  %2125 = vmatmul.bf16.gmra.mxu0 %v1322
  %v2126 = vpop.f32.mrf.mxu0
  %v2127 = vadd.f32 %v2113, %v2126
  %v2128 = vpop.f32.mrf.mxu0
  %v2129 = vadd.f32 %v2115, %v2128
  %2130 = vdwg.mxu0
  %2131 = vmatpush.bf16.msra.mxu0 %v1939
  %2132 = vmatpush.bf16.msra.mxu0 %v1935
  %2133 = vmatpush.bf16.msra.mxu0 %v1931
  %2134 = vmatpush.bf16.msra.mxu0 %v1927
  %2135 = vmatpush.bf16.msra.mxu0 %v1923
  %2136 = vmatpush.bf16.msra.mxu0 %v1919
  %2137 = vmatpush.bf16.msra.mxu0 %v1915
  %2138 = vmatpush.bf16.msra.mxu0 %v1911
  %2139 = vmatmul.bf16.gmra.mxu0 %v1323
  %v2140 = vpop.f32.mrf.mxu0
  %v2141 = vadd.f32 %v2127, %v2140
  %v2142 = vpop.f32.mrf.mxu0
  %v2143 = vadd.f32 %v2129, %v2142
  %2144 = vdwg.mxu0
  %2145 = vmatpush.bf16.msra.mxu0 %v1971
  %2146 = vmatpush.bf16.msra.mxu0 %v1967
  %2147 = vmatpush.bf16.msra.mxu0 %v1963
  %2148 = vmatpush.bf16.msra.mxu0 %v1959
  %2149 = vmatpush.bf16.msra.mxu0 %v1955
  %2150 = vmatpush.bf16.msra.mxu0 %v1951
  %2151 = vmatpush.bf16.msra.mxu0 %v1947
  %2152 = vmatpush.bf16.msra.mxu0 %v1943
  %2153 = vmatmul.bf16.gmra.mxu0 %v1324
  %v2154 = vpop.f32.mrf.mxu0
  %v2155 = vadd.f32 %v2141, %v2154
  %v2156 = vpop.f32.mrf.mxu0
  %v2157 = vadd.f32 %v2143, %v2156
  %2158 = vdwg.mxu0
  %2159 = vmatpush.bf16.msra.mxu0 %v1876
  %2160 = vmatpush.bf16.msra.mxu0 %v1872
  %2161 = vmatpush.bf16.msra.mxu0 %v1868
  %2162 = vmatpush.bf16.msra.mxu0 %v1864
  %2163 = vmatpush.bf16.msra.mxu0 %v1860
  %2164 = vmatpush.bf16.msra.mxu0 %v1856
  %2165 = vmatpush.bf16.msra.mxu0 %v1852
  %2166 = vmatpush.bf16.msra.mxu0 %v1848
  %2167 = vmatmul.bf16.gmra.mxu0 %v1321
  %v2168 = vpop.f32.mrf.mxu0
  %v2169 = vadd.f32 %v1456, %v2168
  %v2170 = vpop.f32.mrf.mxu0
  %v2171 = vadd.f32 %v1456, %v2170
  %2172 = vdwg.mxu0
  %2173 = vmatpush.bf16.msra.mxu0 %v1908
  %2174 = vmatpush.bf16.msra.mxu0 %v1904
  %2175 = vmatpush.bf16.msra.mxu0 %v1900
  %2176 = vmatpush.bf16.msra.mxu0 %v1896
  %2177 = vmatpush.bf16.msra.mxu0 %v1892
  %2178 = vmatpush.bf16.msra.mxu0 %v1888
  %2179 = vmatpush.bf16.msra.mxu0 %v1884
  %2180 = vmatpush.bf16.msra.mxu0 %v1880
  %2181 = vmatmul.bf16.gmra.mxu0 %v1322
  %v2182 = vpop.f32.mrf.mxu0
  %v2183 = vadd.f32 %v2169, %v2182
  %v2184 = vpop.f32.mrf.mxu0
  %v2185 = vadd.f32 %v2171, %v2184
  %2186 = vdwg.mxu0
  %2187 = vmatpush.bf16.msra.mxu0 %v1940
  %2188 = vmatpush.bf16.msra.mxu0 %v1936
  %2189 = vmatpush.bf16.msra.mxu0 %v1932
  %2190 = vmatpush.bf16.msra.mxu0 %v1928
  %2191 = vmatpush.bf16.msra.mxu0 %v1924
  %2192 = vmatpush.bf16.msra.mxu0 %v1920
  %2193 = vmatpush.bf16.msra.mxu0 %v1916
  %2194 = vmatpush.bf16.msra.mxu0 %v1912
  %2195 = vmatmul.bf16.gmra.mxu0 %v1323
  %v2196 = vpop.f32.mrf.mxu0
  %v2197 = vadd.f32 %v2183, %v2196
  %v2198 = vpop.f32.mrf.mxu0
  %v2199 = vadd.f32 %v2185, %v2198
  %2200 = vdwg.mxu0
  %2201 = vmatpush.bf16.msra.mxu0 %v1972
  %2202 = vmatpush.bf16.msra.mxu0 %v1968
  %2203 = vmatpush.bf16.msra.mxu0 %v1964
  %2204 = vmatpush.bf16.msra.mxu0 %v1960
  %2205 = vmatpush.bf16.msra.mxu0 %v1956
  %2206 = vmatpush.bf16.msra.mxu0 %v1952
  %2207 = vmatpush.bf16.msra.mxu0 %v1948
  %2208 = vmatpush.bf16.msra.mxu0 %v1944
  %2209 = vmatmul.bf16.gmra.mxu0 %v1324
  %v2210 = vpop.f32.mrf.mxu0
  %v2211 = vadd.f32 %v2197, %v2210
  %v2212 = vpop.f32.mrf.mxu0
  %v2213 = vadd.f32 %v2199, %v2212
  %2214 = vdwg.mxu0
  %2215 = vmatpush.bf16.msra.mxu0 %v1877
  %2216 = vmatpush.bf16.msra.mxu0 %v1873
  %2217 = vmatpush.bf16.msra.mxu0 %v1869
  %2218 = vmatpush.bf16.msra.mxu0 %v1865
  %2219 = vmatpush.bf16.msra.mxu0 %v1861
  %2220 = vmatpush.bf16.msra.mxu0 %v1857
  %2221 = vmatpush.bf16.msra.mxu0 %v1853
  %2222 = vmatpush.bf16.msra.mxu0 %v1849
  %2223 = vmatmul.bf16.gmra.mxu0 %v1321
  %v2224 = vpop.f32.mrf.mxu0
  %v2225 = vadd.f32 %v1457, %v2224
  %v2226 = vpop.f32.mrf.mxu0
  %v2227 = vadd.f32 %v1457, %v2226
  %2228 = vdwg.mxu0
  %2229 = vmatpush.bf16.msra.mxu0 %v1909
  %2230 = vmatpush.bf16.msra.mxu0 %v1905
  %2231 = vmatpush.bf16.msra.mxu0 %v1901
  %2232 = vmatpush.bf16.msra.mxu0 %v1897
  %2233 = vmatpush.bf16.msra.mxu0 %v1893
  %2234 = vmatpush.bf16.msra.mxu0 %v1889
  %2235 = vmatpush.bf16.msra.mxu0 %v1885
  %2236 = vmatpush.bf16.msra.mxu0 %v1881
  %2237 = vmatmul.bf16.gmra.mxu0 %v1322
  %v2238 = vpop.f32.mrf.mxu0
  %v2239 = vadd.f32 %v2225, %v2238
  %v2240 = vpop.f32.mrf.mxu0
  %v2241 = vadd.f32 %v2227, %v2240
  %2242 = vdwg.mxu0
  %2243 = vmatpush.bf16.msra.mxu0 %v1941
  %2244 = vmatpush.bf16.msra.mxu0 %v1937
  %2245 = vmatpush.bf16.msra.mxu0 %v1933
  %2246 = vmatpush.bf16.msra.mxu0 %v1929
  %2247 = vmatpush.bf16.msra.mxu0 %v1925
  %2248 = vmatpush.bf16.msra.mxu0 %v1921
  %2249 = vmatpush.bf16.msra.mxu0 %v1917
  %2250 = vmatpush.bf16.msra.mxu0 %v1913
  %2251 = vmatmul.bf16.gmra.mxu0 %v1323
  %v2252 = vpop.f32.mrf.mxu0
  %v2253 = vadd.f32 %v2239, %v2252
  %v2254 = vpop.f32.mrf.mxu0
  %v2255 = vadd.f32 %v2241, %v2254
  %2256 = vdwg.mxu0
  %2257 = vmatpush.bf16.msra.mxu0 %v1973
  %2258 = vmatpush.bf16.msra.mxu0 %v1969
  %2259 = vmatpush.bf16.msra.mxu0 %v1965
  %2260 = vmatpush.bf16.msra.mxu0 %v1961
  %2261 = vmatpush.bf16.msra.mxu0 %v1957
  %2262 = vmatpush.bf16.msra.mxu0 %v1953
  %2263 = vmatpush.bf16.msra.mxu0 %v1949
  %2264 = vmatpush.bf16.msra.mxu0 %v1945
  %2265 = vmatmul.bf16.gmra.mxu0 %v1324
  %v2266 = vpop.f32.mrf.mxu0
  %v2267 = vadd.f32 %v2253, %v2266
  %v2268 = vpop.f32.mrf.mxu0
  %v2269 = vadd.f32 %v2255, %v2268
  %2270 = vdwg.mxu0
  %2271 = vmatpush.bf16.msra.mxu0 %v1878
  %2272 = vmatpush.bf16.msra.mxu0 %v1874
  %2273 = vmatpush.bf16.msra.mxu0 %v1870
  %2274 = vmatpush.bf16.msra.mxu0 %v1866
  %2275 = vmatpush.bf16.msra.mxu0 %v1862
  %2276 = vmatpush.bf16.msra.mxu0 %v1858
  %2277 = vmatpush.bf16.msra.mxu0 %v1854
  %2278 = vmatpush.bf16.msra.mxu0 %v1850
  %2279 = vmatmul.bf16.gmra.mxu0 %v1321
  %v2280 = vpop.f32.mrf.mxu0
  %v2281 = vadd.f32 %v1458, %v2280
  %v2282 = vpop.f32.mrf.mxu0
  %v2283 = vadd.f32 %v1458, %v2282
  %2284 = vdwg.mxu0
  %2285 = vmatpush.bf16.msra.mxu0 %v1910
  %2286 = vmatpush.bf16.msra.mxu0 %v1906
  %2287 = vmatpush.bf16.msra.mxu0 %v1902
  %2288 = vmatpush.bf16.msra.mxu0 %v1898
  %2289 = vmatpush.bf16.msra.mxu0 %v1894
  %2290 = vmatpush.bf16.msra.mxu0 %v1890
  %2291 = vmatpush.bf16.msra.mxu0 %v1886
  %2292 = vmatpush.bf16.msra.mxu0 %v1882
  %2293 = vmatmul.bf16.gmra.mxu0 %v1322
  %v2294 = vpop.f32.mrf.mxu0
  %v2295 = vadd.f32 %v2281, %v2294
  %v2296 = vpop.f32.mrf.mxu0
  %v2297 = vadd.f32 %v2283, %v2296
  %2298 = vdwg.mxu0
  %2299 = vmatpush.bf16.msra.mxu0 %v1942
  %2300 = vmatpush.bf16.msra.mxu0 %v1938
  %2301 = vmatpush.bf16.msra.mxu0 %v1934
  %2302 = vmatpush.bf16.msra.mxu0 %v1930
  %2303 = vmatpush.bf16.msra.mxu0 %v1926
  %2304 = vmatpush.bf16.msra.mxu0 %v1922
  %2305 = vmatpush.bf16.msra.mxu0 %v1918
  %2306 = vmatpush.bf16.msra.mxu0 %v1914
  %2307 = vmatmul.bf16.gmra.mxu0 %v1323
  %v2308 = vpop.f32.mrf.mxu0
  %v2309 = vadd.f32 %v2295, %v2308
  %v2310 = vpop.f32.mrf.mxu0
  %v2311 = vadd.f32 %v2297, %v2310
  %2312 = vdwg.mxu0
  %2313 = vmatpush.bf16.msra.mxu0 %v1974
  %2314 = vmatpush.bf16.msra.mxu0 %v1970
  %2315 = vmatpush.bf16.msra.mxu0 %v1966
  %2316 = vmatpush.bf16.msra.mxu0 %v1962
  %2317 = vmatpush.bf16.msra.mxu0 %v1958
  %2318 = vmatpush.bf16.msra.mxu0 %v1954
  %2319 = vmatpush.bf16.msra.mxu0 %v1950
  %2320 = vmatpush.bf16.msra.mxu0 %v1946
  %2321 = vmatmul.bf16.gmra.mxu0 %v1324
  %v2322 = vpop.f32.mrf.mxu0
  %v2323 = vadd.f32 %v2309, %v2322
  %v2324 = vpop.f32.mrf.mxu0
  %v2325 = vadd.f32 %v2311, %v2324
  %2326 = vdwg.mxu0
  %v2327 = vmax.f32 %v2155, 0.0
  %v2328 = vmax.f32 %v2211, 0.0
  %v2329 = vmax.f32 %v2267, 0.0
  %v2330 = vmax.f32 %v2323, 0.0
  %v2331 = vmax.f32 %v2157, 0.0
  %v2332 = vmax.f32 %v2213, 0.0
  %v2333 = vmax.f32 %v2269, 0.0
  %v2334 = vmax.f32 %v2325, 0.0
  %v2335 = vpack.c.bf16 %v2331, %v2327
  %v2336 = vpack.c.bf16 %v2332, %v2328
  %v2337 = vpack.c.bf16 %v2333, %v2329
  %v2338 = vpack.c.bf16 %v2334, %v2330
  %v2339 = vld [vmem:[%s7] sm:$0xff]
  %v2340 = vld [vmem:[%s7 + $0x8] sm:$0xff]
  %v2341 = vld [vmem:[%s7 + $0x10] sm:$0xff]
  %v2342 = vld [vmem:[%s7 + $0x18] sm:$0xff]
  %v2343 = vld [vmem:[%s7 + $0x20] sm:$0xff]
  %v2344 = vld [vmem:[%s7 + $0x28] sm:$0xff]
  %v2345 = vld [vmem:[%s7 + $0x30] sm:$0xff]
  %v2346 = vld [vmem:[%s7 + $0x38] sm:$0xff]
  %v2347 = vld [vmem:[%s7 + $0x40] sm:$0xff]
  %v2348 = vld [vmem:[%s7 + $0x48] sm:$0xff]
  %v2349 = vld [vmem:[%s7 + $0x50] sm:$0xff]
  %v2350 = vld [vmem:[%s7 + $0x58] sm:$0xff]
  %v2351 = vld [vmem:[%s7 + $0x60] sm:$0xff]
  %v2352 = vld [vmem:[%s7 + $0x68] sm:$0xff]
  %v2353 = vld [vmem:[%s7 + $0x70] sm:$0xff]
  %v2354 = vld [vmem:[%s7 + $0x78] sm:$0xff]
  %v2355 = vld [vmem:[%s7 + $0x80] sm:$0xff]
  %v2356 = vld [vmem:[%s7 + $0x88] sm:$0xff]
  %v2357 = vld [vmem:[%s7 + $0x90] sm:$0xff]
  %v2358 = vld [vmem:[%s7 + $0x98] sm:$0xff]
  %v2359 = vld [vmem:[%s7 + $0xa0] sm:$0xff]
  %v2360 = vld [vmem:[%s7 + $0xa8] sm:$0xff]
  %v2361 = vld [vmem:[%s7 + $0xb0] sm:$0xff]
  %v2362 = vld [vmem:[%s7 + $0xb8] sm:$0xff]
  %v2363 = vld [vmem:[%s7 + $0xc0] sm:$0xff]
  %v2364 = vld [vmem:[%s7 + $0xc8] sm:$0xff]
  %v2365 = vld [vmem:[%s7 + $0xd0] sm:$0xff]
  %v2366 = vld [vmem:[%s7 + $0xd8] sm:$0xff]
  %v2367 = vld [vmem:[%s7 + $0xe0] sm:$0xff]
  %v2368 = vld [vmem:[%s7 + $0xe8] sm:$0xff]
  %v2369 = vld [vmem:[%s7 + $0xf0] sm:$0xff]
  %v2370 = vld [vmem:[%s7 + $0xf8] sm:$0xff]
  %v2371 = vld [vmem:[%s7 + $0x100] sm:$0xff]
  %v2372 = vld [vmem:[%s7 + $0x108] sm:$0xff]
  %v2373 = vld [vmem:[%s7 + $0x110] sm:$0xff]
  %v2374 = vld [vmem:[%s7 + $0x118] sm:$0xff]
  %v2375 = vld [vmem:[%s7 + $0x120] sm:$0xff]
  %v2376 = vld [vmem:[%s7 + $0x128] sm:$0xff]
  %v2377 = vld [vmem:[%s7 + $0x130] sm:$0xff]
  %v2378 = vld [vmem:[%s7 + $0x138] sm:$0xff]
  %v2379 = vld [vmem:[%s7 + $0x140] sm:$0xff]
  %v2380 = vld [vmem:[%s7 + $0x148] sm:$0xff]
  %v2381 = vld [vmem:[%s7 + $0x150] sm:$0xff]
  %v2382 = vld [vmem:[%s7 + $0x158] sm:$0xff]
  %v2383 = vld [vmem:[%s7 + $0x160] sm:$0xff]
  %v2384 = vld [vmem:[%s7 + $0x168] sm:$0xff]
  %v2385 = vld [vmem:[%s7 + $0x170] sm:$0xff]
  %v2386 = vld [vmem:[%s7 + $0x178] sm:$0xff]
  %v2387 = vld [vmem:[%s7 + $0x180] sm:$0xff]
  %v2388 = vld [vmem:[%s7 + $0x188] sm:$0xff]
  %v2389 = vld [vmem:[%s7 + $0x190] sm:$0xff]
  %v2390 = vld [vmem:[%s7 + $0x198] sm:$0xff]
  %v2391 = vld [vmem:[%s7 + $0x1a0] sm:$0xff]
  %v2392 = vld [vmem:[%s7 + $0x1a8] sm:$0xff]
  %v2393 = vld [vmem:[%s7 + $0x1b0] sm:$0xff]
  %v2394 = vld [vmem:[%s7 + $0x1b8] sm:$0xff]
  %v2395 = vld [vmem:[%s7 + $0x1c0] sm:$0xff]
  %v2396 = vld [vmem:[%s7 + $0x1c8] sm:$0xff]
  %v2397 = vld [vmem:[%s7 + $0x1d0] sm:$0xff]
  %v2398 = vld [vmem:[%s7 + $0x1d8] sm:$0xff]
  %v2399 = vld [vmem:[%s7 + $0x1e0] sm:$0xff]
  %v2400 = vld [vmem:[%s7 + $0x1e8] sm:$0xff]
  %v2401 = vld [vmem:[%s7 + $0x1f0] sm:$0xff]
  %v2402 = vld [vmem:[%s7 + $0x1f8] sm:$0xff]
  %v2403 = vld [vmem:[%s7 + $0x200] sm:$0xff]
  %v2404 = vld [vmem:[%s7 + $0x208] sm:$0xff]
  %v2405 = vld [vmem:[%s7 + $0x210] sm:$0xff]
  %v2406 = vld [vmem:[%s7 + $0x218] sm:$0xff]
  %v2407 = vld [vmem:[%s7 + $0x220] sm:$0xff]
  %v2408 = vld [vmem:[%s7 + $0x228] sm:$0xff]
  %v2409 = vld [vmem:[%s7 + $0x230] sm:$0xff]
  %v2410 = vld [vmem:[%s7 + $0x238] sm:$0xff]
  %v2411 = vld [vmem:[%s7 + $0x240] sm:$0xff]
  %v2412 = vld [vmem:[%s7 + $0x248] sm:$0xff]
  %v2413 = vld [vmem:[%s7 + $0x250] sm:$0xff]
  %v2414 = vld [vmem:[%s7 + $0x258] sm:$0xff]
  %v2415 = vld [vmem:[%s7 + $0x260] sm:$0xff]
  %v2416 = vld [vmem:[%s7 + $0x268] sm:$0xff]
  %v2417 = vld [vmem:[%s7 + $0x270] sm:$0xff]
  %v2418 = vld [vmem:[%s7 + $0x278] sm:$0xff]
  %v2419 = vld [vmem:[%s7 + $0x280] sm:$0xff]
  %v2420 = vld [vmem:[%s7 + $0x288] sm:$0xff]
  %v2421 = vld [vmem:[%s7 + $0x290] sm:$0xff]
  %v2422 = vld [vmem:[%s7 + $0x298] sm:$0xff]
  %v2423 = vld [vmem:[%s7 + $0x2a0] sm:$0xff]
  %v2424 = vld [vmem:[%s7 + $0x2a8] sm:$0xff]
  %v2425 = vld [vmem:[%s7 + $0x2b0] sm:$0xff]
  %v2426 = vld [vmem:[%s7 + $0x2b8] sm:$0xff]
  %v2427 = vld [vmem:[%s7 + $0x2c0] sm:$0xff]
  %v2428 = vld [vmem:[%s7 + $0x2c8] sm:$0xff]
  %v2429 = vld [vmem:[%s7 + $0x2d0] sm:$0xff]
  %v2430 = vld [vmem:[%s7 + $0x2d8] sm:$0xff]
  %v2431 = vld [vmem:[%s7 + $0x2e0] sm:$0xff]
  %v2432 = vld [vmem:[%s7 + $0x2e8] sm:$0xff]
  %v2433 = vld [vmem:[%s7 + $0x2f0] sm:$0xff]
  %v2434 = vld [vmem:[%s7 + $0x2f8] sm:$0xff]
  %v2435 = vld [vmem:[%s7 + $0x300] sm:$0xff]
  %v2436 = vld [vmem:[%s7 + $0x308] sm:$0xff]
  %v2437 = vld [vmem:[%s7 + $0x310] sm:$0xff]
  %v2438 = vld [vmem:[%s7 + $0x318] sm:$0xff]
  %v2439 = vld [vmem:[%s7 + $0x320] sm:$0xff]
  %v2440 = vld [vmem:[%s7 + $0x328] sm:$0xff]
  %v2441 = vld [vmem:[%s7 + $0x330] sm:$0xff]
  %v2442 = vld [vmem:[%s7 + $0x338] sm:$0xff]
  %v2443 = vld [vmem:[%s7 + $0x340] sm:$0xff]
  %v2444 = vld [vmem:[%s7 + $0x348] sm:$0xff]
  %v2445 = vld [vmem:[%s7 + $0x350] sm:$0xff]
  %v2446 = vld [vmem:[%s7 + $0x358] sm:$0xff]
  %v2447 = vld [vmem:[%s7 + $0x360] sm:$0xff]
  %v2448 = vld [vmem:[%s7 + $0x368] sm:$0xff]
  %v2449 = vld [vmem:[%s7 + $0x370] sm:$0xff]
  %v2450 = vld [vmem:[%s7 + $0x378] sm:$0xff]
  %v2451 = vld [vmem:[%s7 + $0x380] sm:$0xff]
  %v2452 = vld [vmem:[%s7 + $0x388] sm:$0xff]
  %v2453 = vld [vmem:[%s7 + $0x390] sm:$0xff]
  %v2454 = vld [vmem:[%s7 + $0x398] sm:$0xff]
  %v2455 = vld [vmem:[%s7 + $0x3a0] sm:$0xff]
  %v2456 = vld [vmem:[%s7 + $0x3a8] sm:$0xff]
  %v2457 = vld [vmem:[%s7 + $0x3b0] sm:$0xff]
  %v2458 = vld [vmem:[%s7 + $0x3b8] sm:$0xff]
  %v2459 = vld [vmem:[%s7 + $0x3c0] sm:$0xff]
  %v2460 = vld [vmem:[%s7 + $0x3c8] sm:$0xff]
  %v2461 = vld [vmem:[%s7 + $0x3d0] sm:$0xff]
  %v2462 = vld [vmem:[%s7 + $0x3d8] sm:$0xff]
  %v2463 = vld [vmem:[%s7 + $0x3e0] sm:$0xff]
  %v2464 = vld [vmem:[%s7 + $0x3e8] sm:$0xff]
  %v2465 = vld [vmem:[%s7 + $0x3f0] sm:$0xff]
  %v2466 = vld [vmem:[%s7 + $0x3f8] sm:$0xff]
  %v2467 = vld [vmem:[%s8] sm:$0xf]
  %v2469 = vperm.slane %v2467, 0
  %v2470 = vperm.slane %v2467, 1
  %v2471 = vperm.slane %v2467, 2
  %v2472 = vperm.slane %v2467, 3
  %v2605 = vunpack.c.l.b16 %v2339
  %v2606 = vunpack.c.h.b16 %v2339
  %v2607 = vunpack.c.l.b16 %v2340
  %v2608 = vunpack.c.h.b16 %v2340
  %v2609 = vunpack.c.l.b16 %v2341
  %v2610 = vunpack.c.h.b16 %v2341
  %v2611 = vunpack.c.l.b16 %v2342
  %v2612 = vunpack.c.h.b16 %v2342
  %v2613 = vunpack.c.l.b16 %v2343
  %v2614 = vunpack.c.h.b16 %v2343
  %v2615 = vunpack.c.l.b16 %v2344
  %v2616 = vunpack.c.h.b16 %v2344
  %v2617 = vunpack.c.l.b16 %v2345
  %v2618 = vunpack.c.h.b16 %v2345
  %v2619 = vunpack.c.l.b16 %v2346
  %v2620 = vunpack.c.h.b16 %v2346
  %v2621 = vunpack.c.l.b16 %v2347
  %v2622 = vunpack.c.h.b16 %v2347
  %v2623 = vunpack.c.l.b16 %v2348
  %v2624 = vunpack.c.h.b16 %v2348
  %v2625 = vunpack.c.l.b16 %v2349
  %v2626 = vunpack.c.h.b16 %v2349
  %v2627 = vunpack.c.l.b16 %v2350
  %v2628 = vunpack.c.h.b16 %v2350
  %v2629 = vunpack.c.l.b16 %v2351
  %v2630 = vunpack.c.h.b16 %v2351
  %v2631 = vunpack.c.l.b16 %v2352
  %v2632 = vunpack.c.h.b16 %v2352
  %v2633 = vunpack.c.l.b16 %v2353
  %v2634 = vunpack.c.h.b16 %v2353
  %v2635 = vunpack.c.l.b16 %v2354
  %v2636 = vunpack.c.h.b16 %v2354
  %v2637 = vunpack.c.l.b16 %v2355
  %v2638 = vunpack.c.h.b16 %v2355
  %v2639 = vunpack.c.l.b16 %v2356
  %v2640 = vunpack.c.h.b16 %v2356
  %v2641 = vunpack.c.l.b16 %v2357
  %v2642 = vunpack.c.h.b16 %v2357
  %v2643 = vunpack.c.l.b16 %v2358
  %v2644 = vunpack.c.h.b16 %v2358
  %v2645 = vunpack.c.l.b16 %v2359
  %v2646 = vunpack.c.h.b16 %v2359
  %v2647 = vunpack.c.l.b16 %v2360
  %v2648 = vunpack.c.h.b16 %v2360
  %v2649 = vunpack.c.l.b16 %v2361
  %v2650 = vunpack.c.h.b16 %v2361
  %v2651 = vunpack.c.l.b16 %v2362
  %v2652 = vunpack.c.h.b16 %v2362
  %v2653 = vunpack.c.l.b16 %v2363
  %v2654 = vunpack.c.h.b16 %v2363
  %v2655 = vunpack.c.l.b16 %v2364
  %v2656 = vunpack.c.h.b16 %v2364
  %v2657 = vunpack.c.l.b16 %v2365
  %v2658 = vunpack.c.h.b16 %v2365
  %v2659 = vunpack.c.l.b16 %v2366
  %v2660 = vunpack.c.h.b16 %v2366
  %v2661 = vunpack.c.l.b16 %v2367
  %v2662 = vunpack.c.h.b16 %v2367
  %v2663 = vunpack.c.l.b16 %v2368
  %v2664 = vunpack.c.h.b16 %v2368
  %v2665 = vunpack.c.l.b16 %v2369
  %v2666 = vunpack.c.h.b16 %v2369
  %v2667 = vunpack.c.l.b16 %v2370
  %v2668 = vunpack.c.h.b16 %v2370
  %v2669 = vunpack.c.l.b16 %v2371
  %v2670 = vunpack.c.h.b16 %v2371
  %v2671 = vunpack.c.l.b16 %v2372
  %v2672 = vunpack.c.h.b16 %v2372
  %v2673 = vunpack.c.l.b16 %v2373
  %v2674 = vunpack.c.h.b16 %v2373
  %v2675 = vunpack.c.l.b16 %v2374
  %v2676 = vunpack.c.h.b16 %v2374
  %v2677 = vunpack.c.l.b16 %v2375
  %v2678 = vunpack.c.h.b16 %v2375
  %v2679 = vunpack.c.l.b16 %v2376
  %v2680 = vunpack.c.h.b16 %v2376
  %v2681 = vunpack.c.l.b16 %v2377
  %v2682 = vunpack.c.h.b16 %v2377
  %v2683 = vunpack.c.l.b16 %v2378
  %v2684 = vunpack.c.h.b16 %v2378
  %v2685 = vunpack.c.l.b16 %v2379
  %v2686 = vunpack.c.h.b16 %v2379
  %v2687 = vunpack.c.l.b16 %v2380
  %v2688 = vunpack.c.h.b16 %v2380
  %v2689 = vunpack.c.l.b16 %v2381
  %v2690 = vunpack.c.h.b16 %v2381
  %v2691 = vunpack.c.l.b16 %v2382
  %v2692 = vunpack.c.h.b16 %v2382
  %v2693 = vunpack.c.l.b16 %v2383
  %v2694 = vunpack.c.h.b16 %v2383
  %v2695 = vunpack.c.l.b16 %v2384
  %v2696 = vunpack.c.h.b16 %v2384
  %v2697 = vunpack.c.l.b16 %v2385
  %v2698 = vunpack.c.h.b16 %v2385
  %v2699 = vunpack.c.l.b16 %v2386
  %v2700 = vunpack.c.h.b16 %v2386
  %v2701 = vunpack.c.l.b16 %v2387
  %v2702 = vunpack.c.h.b16 %v2387
  %v2703 = vunpack.c.l.b16 %v2388
  %v2704 = vunpack.c.h.b16 %v2388
  %v2705 = vunpack.c.l.b16 %v2389
  %v2706 = vunpack.c.h.b16 %v2389
  %v2707 = vunpack.c.l.b16 %v2390
  %v2708 = vunpack.c.h.b16 %v2390
  %v2709 = vunpack.c.l.b16 %v2391
  %v2710 = vunpack.c.h.b16 %v2391
  %v2711 = vunpack.c.l.b16 %v2392
  %v2712 = vunpack.c.h.b16 %v2392
  %v2713 = vunpack.c.l.b16 %v2393
  %v2714 = vunpack.c.h.b16 %v2393
  %v2715 = vunpack.c.l.b16 %v2394
  %v2716 = vunpack.c.h.b16 %v2394
  %v2717 = vunpack.c.l.b16 %v2395
  %v2718 = vunpack.c.h.b16 %v2395
  %v2719 = vunpack.c.l.b16 %v2396
  %v2720 = vunpack.c.h.b16 %v2396
  %v2721 = vunpack.c.l.b16 %v2397
  %v2722 = vunpack.c.h.b16 %v2397
  %v2723 = vunpack.c.l.b16 %v2398
  %v2724 = vunpack.c.h.b16 %v2398
  %v2725 = vunpack.c.l.b16 %v2399
  %v2726 = vunpack.c.h.b16 %v2399
  %v2727 = vunpack.c.l.b16 %v2400
  %v2728 = vunpack.c.h.b16 %v2400
  %v2729 = vunpack.c.l.b16 %v2401
  %v2730 = vunpack.c.h.b16 %v2401
  %v2731 = vunpack.c.l.b16 %v2402
  %v2732 = vunpack.c.h.b16 %v2402
  %v2733 = vunpack.c.l.b16 %v2403
  %v2734 = vunpack.c.h.b16 %v2403
  %v2735 = vunpack.c.l.b16 %v2404
  %v2736 = vunpack.c.h.b16 %v2404
  %v2737 = vunpack.c.l.b16 %v2405
  %v2738 = vunpack.c.h.b16 %v2405
  %v2739 = vunpack.c.l.b16 %v2406
  %v2740 = vunpack.c.h.b16 %v2406
  %v2741 = vunpack.c.l.b16 %v2407
  %v2742 = vunpack.c.h.b16 %v2407
  %v2743 = vunpack.c.l.b16 %v2408
  %v2744 = vunpack.c.h.b16 %v2408
  %v2745 = vunpack.c.l.b16 %v2409
  %v2746 = vunpack.c.h.b16 %v2409
  %v2747 = vunpack.c.l.b16 %v2410
  %v2748 = vunpack.c.h.b16 %v2410
  %v2749 = vunpack.c.l.b16 %v2411
  %v2750 = vunpack.c.h.b16 %v2411
  %v2751 = vunpack.c.l.b16 %v2412
  %v2752 = vunpack.c.h.b16 %v2412
  %v2753 = vunpack.c.l.b16 %v2413
  %v2754 = vunpack.c.h.b16 %v2413
  %v2755 = vunpack.c.l.b16 %v2414
  %v2756 = vunpack.c.h.b16 %v2414
  %v2757 = vunpack.c.l.b16 %v2415
  %v2758 = vunpack.c.h.b16 %v2415
  %v2759 = vunpack.c.l.b16 %v2416
  %v2760 = vunpack.c.h.b16 %v2416
  %v2761 = vunpack.c.l.b16 %v2417
  %v2762 = vunpack.c.h.b16 %v2417
  %v2763 = vunpack.c.l.b16 %v2418
  %v2764 = vunpack.c.h.b16 %v2418
  %v2765 = vunpack.c.l.b16 %v2419
  %v2766 = vunpack.c.h.b16 %v2419
  %v2767 = vunpack.c.l.b16 %v2420
  %v2768 = vunpack.c.h.b16 %v2420
  %v2769 = vunpack.c.l.b16 %v2421
  %v2770 = vunpack.c.h.b16 %v2421
  %v2771 = vunpack.c.l.b16 %v2422
  %v2772 = vunpack.c.h.b16 %v2422
  %v2773 = vunpack.c.l.b16 %v2423
  %v2774 = vunpack.c.h.b16 %v2423
  %v2775 = vunpack.c.l.b16 %v2424
  %v2776 = vunpack.c.h.b16 %v2424
  %v2777 = vunpack.c.l.b16 %v2425
  %v2778 = vunpack.c.h.b16 %v2425
  %v2779 = vunpack.c.l.b16 %v2426
  %v2780 = vunpack.c.h.b16 %v2426
  %v2781 = vunpack.c.l.b16 %v2427
  %v2782 = vunpack.c.h.b16 %v2427
  %v2783 = vunpack.c.l.b16 %v2428
  %v2784 = vunpack.c.h.b16 %v2428
  %v2785 = vunpack.c.l.b16 %v2429
  %v2786 = vunpack.c.h.b16 %v2429
  %v2787 = vunpack.c.l.b16 %v2430
  %v2788 = vunpack.c.h.b16 %v2430
  %v2789 = vunpack.c.l.b16 %v2431
  %v2790 = vunpack.c.h.b16 %v2431
  %v2791 = vunpack.c.l.b16 %v2432
  %v2792 = vunpack.c.h.b16 %v2432
  %v2793 = vunpack.c.l.b16 %v2433
  %v2794 = vunpack.c.h.b16 %v2433
  %v2795 = vunpack.c.l.b16 %v2434
  %v2796 = vunpack.c.h.b16 %v2434
  %v2797 = vunpack.c.l.b16 %v2435
  %v2798 = vunpack.c.h.b16 %v2435
  %v2799 = vunpack.c.l.b16 %v2436
  %v2800 = vunpack.c.h.b16 %v2436
  %v2801 = vunpack.c.l.b16 %v2437
  %v2802 = vunpack.c.h.b16 %v2437
  %v2803 = vunpack.c.l.b16 %v2438
  %v2804 = vunpack.c.h.b16 %v2438
  %v2805 = vunpack.c.l.b16 %v2439
  %v2806 = vunpack.c.h.b16 %v2439
  %v2807 = vunpack.c.l.b16 %v2440
  %v2808 = vunpack.c.h.b16 %v2440
  %v2809 = vunpack.c.l.b16 %v2441
  %v2810 = vunpack.c.h.b16 %v2441
  %v2811 = vunpack.c.l.b16 %v2442
  %v2812 = vunpack.c.h.b16 %v2442
  %v2813 = vunpack.c.l.b16 %v2443
  %v2814 = vunpack.c.h.b16 %v2443
  %v2815 = vunpack.c.l.b16 %v2444
  %v2816 = vunpack.c.h.b16 %v2444
  %v2817 = vunpack.c.l.b16 %v2445
  %v2818 = vunpack.c.h.b16 %v2445
  %v2819 = vunpack.c.l.b16 %v2446
  %v2820 = vunpack.c.h.b16 %v2446
  %v2821 = vunpack.c.l.b16 %v2447
  %v2822 = vunpack.c.h.b16 %v2447
  %v2823 = vunpack.c.l.b16 %v2448
  %v2824 = vunpack.c.h.b16 %v2448
  %v2825 = vunpack.c.l.b16 %v2449
  %v2826 = vunpack.c.h.b16 %v2449
  %v2827 = vunpack.c.l.b16 %v2450
  %v2828 = vunpack.c.h.b16 %v2450
  %v2829 = vunpack.c.l.b16 %v2451
  %v2830 = vunpack.c.h.b16 %v2451
  %v2831 = vunpack.c.l.b16 %v2452
  %v2832 = vunpack.c.h.b16 %v2452
  %v2833 = vunpack.c.l.b16 %v2453
  %v2834 = vunpack.c.h.b16 %v2453
  %v2835 = vunpack.c.l.b16 %v2454
  %v2836 = vunpack.c.h.b16 %v2454
  %v2837 = vunpack.c.l.b16 %v2455
  %v2838 = vunpack.c.h.b16 %v2455
  %v2839 = vunpack.c.l.b16 %v2456
  %v2840 = vunpack.c.h.b16 %v2456
  %v2841 = vunpack.c.l.b16 %v2457
  %v2842 = vunpack.c.h.b16 %v2457
  %v2843 = vunpack.c.l.b16 %v2458
  %v2844 = vunpack.c.h.b16 %v2458
  %v2845 = vunpack.c.l.b16 %v2459
  %v2846 = vunpack.c.h.b16 %v2459
  %v2847 = vunpack.c.l.b16 %v2460
  %v2848 = vunpack.c.h.b16 %v2460
  %v2849 = vunpack.c.l.b16 %v2461
  %v2850 = vunpack.c.h.b16 %v2461
  %v2851 = vunpack.c.l.b16 %v2462
  %v2852 = vunpack.c.h.b16 %v2462
  %v2853 = vunpack.c.l.b16 %v2463
  %v2854 = vunpack.c.h.b16 %v2463
  %v2855 = vunpack.c.l.b16 %v2464
  %v2856 = vunpack.c.h.b16 %v2464
  %v2857 = vunpack.c.l.b16 %v2465
  %v2858 = vunpack.c.h.b16 %v2465
  %v2859 = vunpack.c.l.b16 %v2466
  %v2860 = vunpack.c.h.b16 %v2466
  %v2861 = vpack.c.b16 %v2609, %v2605
  %v2862 = vpack.c.b16 %v2610, %v2606
  %v2863 = vpack.c.b16 %v2611, %v2607
  %v2864 = vpack.c.b16 %v2612, %v2608
  %v2865 = vpack.c.b16 %v2617, %v2613
  %v2866 = vpack.c.b16 %v2618, %v2614
  %v2867 = vpack.c.b16 %v2619, %v2615
  %v2868 = vpack.c.b16 %v2620, %v2616
  %v2869 = vpack.c.b16 %v2625, %v2621
  %v2870 = vpack.c.b16 %v2626, %v2622
  %v2871 = vpack.c.b16 %v2627, %v2623
  %v2872 = vpack.c.b16 %v2628, %v2624
  %v2873 = vpack.c.b16 %v2633, %v2629
  %v2874 = vpack.c.b16 %v2634, %v2630
  %v2875 = vpack.c.b16 %v2635, %v2631
  %v2876 = vpack.c.b16 %v2636, %v2632
  %v2877 = vpack.c.b16 %v2641, %v2637
  %v2878 = vpack.c.b16 %v2642, %v2638
  %v2879 = vpack.c.b16 %v2643, %v2639
  %v2880 = vpack.c.b16 %v2644, %v2640
  %v2881 = vpack.c.b16 %v2649, %v2645
  %v2882 = vpack.c.b16 %v2650, %v2646
  %v2883 = vpack.c.b16 %v2651, %v2647
  %v2884 = vpack.c.b16 %v2652, %v2648
  %v2885 = vpack.c.b16 %v2657, %v2653
  %v2886 = vpack.c.b16 %v2658, %v2654
  %v2887 = vpack.c.b16 %v2659, %v2655
  %v2888 = vpack.c.b16 %v2660, %v2656
  %v2889 = vpack.c.b16 %v2665, %v2661
  %v2890 = vpack.c.b16 %v2666, %v2662
  %v2891 = vpack.c.b16 %v2667, %v2663
  %v2892 = vpack.c.b16 %v2668, %v2664
  %v2893 = vpack.c.b16 %v2673, %v2669
  %v2894 = vpack.c.b16 %v2674, %v2670
  %v2895 = vpack.c.b16 %v2675, %v2671
  %v2896 = vpack.c.b16 %v2676, %v2672
  %v2897 = vpack.c.b16 %v2681, %v2677
  %v2898 = vpack.c.b16 %v2682, %v2678
  %v2899 = vpack.c.b16 %v2683, %v2679
  %v2900 = vpack.c.b16 %v2684, %v2680
  %v2901 = vpack.c.b16 %v2689, %v2685
  %v2902 = vpack.c.b16 %v2690, %v2686
  %v2903 = vpack.c.b16 %v2691, %v2687
  %v2904 = vpack.c.b16 %v2692, %v2688
  %v2905 = vpack.c.b16 %v2697, %v2693
  %v2906 = vpack.c.b16 %v2698, %v2694
  %v2907 = vpack.c.b16 %v2699, %v2695
  %v2908 = vpack.c.b16 %v2700, %v2696
  %v2909 = vpack.c.b16 %v2705, %v2701
  %v2910 = vpack.c.b16 %v2706, %v2702
  %v2911 = vpack.c.b16 %v2707, %v2703
  %v2912 = vpack.c.b16 %v2708, %v2704
  %v2913 = vpack.c.b16 %v2713, %v2709
  %v2914 = vpack.c.b16 %v2714, %v2710
  %v2915 = vpack.c.b16 %v2715, %v2711
  %v2916 = vpack.c.b16 %v2716, %v2712
  %v2917 = vpack.c.b16 %v2721, %v2717
  %v2918 = vpack.c.b16 %v2722, %v2718
  %v2919 = vpack.c.b16 %v2723, %v2719
  %v2920 = vpack.c.b16 %v2724, %v2720
  %v2921 = vpack.c.b16 %v2729, %v2725
  %v2922 = vpack.c.b16 %v2730, %v2726
  %v2923 = vpack.c.b16 %v2731, %v2727
  %v2924 = vpack.c.b16 %v2732, %v2728
  %v2925 = vpack.c.b16 %v2737, %v2733
  %v2926 = vpack.c.b16 %v2738, %v2734
  %v2927 = vpack.c.b16 %v2739, %v2735
  %v2928 = vpack.c.b16 %v2740, %v2736
  %v2929 = vpack.c.b16 %v2745, %v2741
  %v2930 = vpack.c.b16 %v2746, %v2742
  %v2931 = vpack.c.b16 %v2747, %v2743
  %v2932 = vpack.c.b16 %v2748, %v2744
  %v2933 = vpack.c.b16 %v2753, %v2749
  %v2934 = vpack.c.b16 %v2754, %v2750
  %v2935 = vpack.c.b16 %v2755, %v2751
  %v2936 = vpack.c.b16 %v2756, %v2752
  %v2937 = vpack.c.b16 %v2761, %v2757
  %v2938 = vpack.c.b16 %v2762, %v2758
  %v2939 = vpack.c.b16 %v2763, %v2759
  %v2940 = vpack.c.b16 %v2764, %v2760
  %v2941 = vpack.c.b16 %v2769, %v2765
  %v2942 = vpack.c.b16 %v2770, %v2766
  %v2943 = vpack.c.b16 %v2771, %v2767
  %v2944 = vpack.c.b16 %v2772, %v2768
  %v2945 = vpack.c.b16 %v2777, %v2773
  %v2946 = vpack.c.b16 %v2778, %v2774
  %v2947 = vpack.c.b16 %v2779, %v2775
  %v2948 = vpack.c.b16 %v2780, %v2776
  %v2949 = vpack.c.b16 %v2785, %v2781
  %v2950 = vpack.c.b16 %v2786, %v2782
  %v2951 = vpack.c.b16 %v2787, %v2783
  %v2952 = vpack.c.b16 %v2788, %v2784
  %v2953 = vpack.c.b16 %v2793, %v2789
  %v2954 = vpack.c.b16 %v2794, %v2790
  %v2955 = vpack.c.b16 %v2795, %v2791
  %v2956 = vpack.c.b16 %v2796, %v2792
  %v2957 = vpack.c.b16 %v2801, %v2797
  %v2958 = vpack.c.b16 %v2802, %v2798
  %v2959 = vpack.c.b16 %v2803, %v2799
  %v2960 = vpack.c.b16 %v2804, %v2800
  %v2961 = vpack.c.b16 %v2809, %v2805
  %v2962 = vpack.c.b16 %v2810, %v2806
  %v2963 = vpack.c.b16 %v2811, %v2807
  %v2964 = vpack.c.b16 %v2812, %v2808
  %v2965 = vpack.c.b16 %v2817, %v2813
  %v2966 = vpack.c.b16 %v2818, %v2814
  %v2967 = vpack.c.b16 %v2819, %v2815
  %v2968 = vpack.c.b16 %v2820, %v2816
  %v2969 = vpack.c.b16 %v2825, %v2821
  %v2970 = vpack.c.b16 %v2826, %v2822
  %v2971 = vpack.c.b16 %v2827, %v2823
  %v2972 = vpack.c.b16 %v2828, %v2824
  %v2973 = vpack.c.b16 %v2833, %v2829
  %v2974 = vpack.c.b16 %v2834, %v2830
  %v2975 = vpack.c.b16 %v2835, %v2831
  %v2976 = vpack.c.b16 %v2836, %v2832
  %v2977 = vpack.c.b16 %v2841, %v2837
  %v2978 = vpack.c.b16 %v2842, %v2838
  %v2979 = vpack.c.b16 %v2843, %v2839
  %v2980 = vpack.c.b16 %v2844, %v2840
  %v2981 = vpack.c.b16 %v2849, %v2845
  %v2982 = vpack.c.b16 %v2850, %v2846
  %v2983 = vpack.c.b16 %v2851, %v2847
  %v2984 = vpack.c.b16 %v2852, %v2848
  %v2985 = vpack.c.b16 %v2857, %v2853
  %v2986 = vpack.c.b16 %v2858, %v2854
  %v2987 = vpack.c.b16 %v2859, %v2855
  %v2988 = vpack.c.b16 %v2860, %v2856
  %3117 = vmatpush.bf16.msra.mxu0 %v2889
  %3118 = vmatpush.bf16.msra.mxu0 %v2885
  %3119 = vmatpush.bf16.msra.mxu0 %v2881
  %3120 = vmatpush.bf16.msra.mxu0 %v2877
  %3121 = vmatpush.bf16.msra.mxu0 %v2873
  %3122 = vmatpush.bf16.msra.mxu0 %v2869
  %3123 = vmatpush.bf16.msra.mxu0 %v2865
  %3124 = vmatpush.bf16.msra.mxu0 %v2861
  %3125 = vmatmul.bf16.gmra.mxu0 %v2335
  %v3126 = vpop.f32.mrf.mxu0
  %v3127 = vadd.f32 %v2469, %v3126
  %v3128 = vpop.f32.mrf.mxu0
  %v3129 = vadd.f32 %v2469, %v3128
  %3130 = vdwg.mxu0
  %3131 = vmatpush.bf16.msra.mxu0 %v2921
  %3132 = vmatpush.bf16.msra.mxu0 %v2917
  %3133 = vmatpush.bf16.msra.mxu0 %v2913
  %3134 = vmatpush.bf16.msra.mxu0 %v2909
  %3135 = vmatpush.bf16.msra.mxu0 %v2905
  %3136 = vmatpush.bf16.msra.mxu0 %v2901
  %3137 = vmatpush.bf16.msra.mxu0 %v2897
  %3138 = vmatpush.bf16.msra.mxu0 %v2893
  %3139 = vmatmul.bf16.gmra.mxu0 %v2336
  %v3140 = vpop.f32.mrf.mxu0
  %v3141 = vadd.f32 %v3127, %v3140
  %v3142 = vpop.f32.mrf.mxu0
  %v3143 = vadd.f32 %v3129, %v3142
  %3144 = vdwg.mxu0
  %3145 = vmatpush.bf16.msra.mxu0 %v2953
  %3146 = vmatpush.bf16.msra.mxu0 %v2949
  %3147 = vmatpush.bf16.msra.mxu0 %v2945
  %3148 = vmatpush.bf16.msra.mxu0 %v2941
  %3149 = vmatpush.bf16.msra.mxu0 %v2937
  %3150 = vmatpush.bf16.msra.mxu0 %v2933
  %3151 = vmatpush.bf16.msra.mxu0 %v2929
  %3152 = vmatpush.bf16.msra.mxu0 %v2925
  %3153 = vmatmul.bf16.gmra.mxu0 %v2337
  %v3154 = vpop.f32.mrf.mxu0
  %v3155 = vadd.f32 %v3141, %v3154
  %v3156 = vpop.f32.mrf.mxu0
  %v3157 = vadd.f32 %v3143, %v3156
  %3158 = vdwg.mxu0
  %3159 = vmatpush.bf16.msra.mxu0 %v2985
  %3160 = vmatpush.bf16.msra.mxu0 %v2981
  %3161 = vmatpush.bf16.msra.mxu0 %v2977
  %3162 = vmatpush.bf16.msra.mxu0 %v2973
  %3163 = vmatpush.bf16.msra.mxu0 %v2969
  %3164 = vmatpush.bf16.msra.mxu0 %v2965
  %3165 = vmatpush.bf16.msra.mxu0 %v2961
  %3166 = vmatpush.bf16.msra.mxu0 %v2957
  %3167 = vmatmul.bf16.gmra.mxu0 %v2338
  %v3168 = vpop.f32.mrf.mxu0
  %v3169 = vadd.f32 %v3155, %v3168
  %v3170 = vpop.f32.mrf.mxu0
  %v3171 = vadd.f32 %v3157, %v3170
  %3172 = vdwg.mxu0
  %3173 = vmatpush.bf16.msra.mxu0 %v2890
  %3174 = vmatpush.bf16.msra.mxu0 %v2886
  %3175 = vmatpush.bf16.msra.mxu0 %v2882
  %3176 = vmatpush.bf16.msra.mxu0 %v2878
  %3177 = vmatpush.bf16.msra.mxu0 %v2874
  %3178 = vmatpush.bf16.msra.mxu0 %v2870
  %3179 = vmatpush.bf16.msra.mxu0 %v2866
  %3180 = vmatpush.bf16.msra.mxu0 %v2862
  %3181 = vmatmul.bf16.gmra.mxu0 %v2335
  %v3182 = vpop.f32.mrf.mxu0
  %v3183 = vadd.f32 %v2470, %v3182
  %v3184 = vpop.f32.mrf.mxu0
  %v3185 = vadd.f32 %v2470, %v3184
  %3186 = vdwg.mxu0
  %3187 = vmatpush.bf16.msra.mxu0 %v2922
  %3188 = vmatpush.bf16.msra.mxu0 %v2918
  %3189 = vmatpush.bf16.msra.mxu0 %v2914
  %3190 = vmatpush.bf16.msra.mxu0 %v2910
  %3191 = vmatpush.bf16.msra.mxu0 %v2906
  %3192 = vmatpush.bf16.msra.mxu0 %v2902
  %3193 = vmatpush.bf16.msra.mxu0 %v2898
  %3194 = vmatpush.bf16.msra.mxu0 %v2894
  %3195 = vmatmul.bf16.gmra.mxu0 %v2336
  %v3196 = vpop.f32.mrf.mxu0
  %v3197 = vadd.f32 %v3183, %v3196
  %v3198 = vpop.f32.mrf.mxu0
  %v3199 = vadd.f32 %v3185, %v3198
  %3200 = vdwg.mxu0
  %3201 = vmatpush.bf16.msra.mxu0 %v2954
  %3202 = vmatpush.bf16.msra.mxu0 %v2950
  %3203 = vmatpush.bf16.msra.mxu0 %v2946
  %3204 = vmatpush.bf16.msra.mxu0 %v2942
  %3205 = vmatpush.bf16.msra.mxu0 %v2938
  %3206 = vmatpush.bf16.msra.mxu0 %v2934
  %3207 = vmatpush.bf16.msra.mxu0 %v2930
  %3208 = vmatpush.bf16.msra.mxu0 %v2926
  %3209 = vmatmul.bf16.gmra.mxu0 %v2337
  %v3210 = vpop.f32.mrf.mxu0
  %v3211 = vadd.f32 %v3197, %v3210
  %v3212 = vpop.f32.mrf.mxu0
  %v3213 = vadd.f32 %v3199, %v3212
  %3214 = vdwg.mxu0
  %3215 = vmatpush.bf16.msra.mxu0 %v2986
  %3216 = vmatpush.bf16.msra.mxu0 %v2982
  %3217 = vmatpush.bf16.msra.mxu0 %v2978
  %3218 = vmatpush.bf16.msra.mxu0 %v2974
  %3219 = vmatpush.bf16.msra.mxu0 %v2970
  %3220 = vmatpush.bf16.msra.mxu0 %v2966
  %3221 = vmatpush.bf16.msra.mxu0 %v2962
  %3222 = vmatpush.bf16.msra.mxu0 %v2958
  %3223 = vmatmul.bf16.gmra.mxu0 %v2338
  %v3224 = vpop.f32.mrf.mxu0
  %v3225 = vadd.f32 %v3211, %v3224
  %v3226 = vpop.f32.mrf.mxu0
  %v3227 = vadd.f32 %v3213, %v3226
  %3228 = vdwg.mxu0
  %3229 = vmatpush.bf16.msra.mxu0 %v2891
  %3230 = vmatpush.bf16.msra.mxu0 %v2887
  %3231 = vmatpush.bf16.msra.mxu0 %v2883
  %3232 = vmatpush.bf16.msra.mxu0 %v2879
  %3233 = vmatpush.bf16.msra.mxu0 %v2875
  %3234 = vmatpush.bf16.msra.mxu0 %v2871
  %3235 = vmatpush.bf16.msra.mxu0 %v2867
  %3236 = vmatpush.bf16.msra.mxu0 %v2863
  %3237 = vmatmul.bf16.gmra.mxu0 %v2335
  %v3238 = vpop.f32.mrf.mxu0
  %v3239 = vadd.f32 %v2471, %v3238
  %v3240 = vpop.f32.mrf.mxu0
  %v3241 = vadd.f32 %v2471, %v3240
  %3242 = vdwg.mxu0
  %3243 = vmatpush.bf16.msra.mxu0 %v2923
  %3244 = vmatpush.bf16.msra.mxu0 %v2919
  %3245 = vmatpush.bf16.msra.mxu0 %v2915
  %3246 = vmatpush.bf16.msra.mxu0 %v2911
  %3247 = vmatpush.bf16.msra.mxu0 %v2907
  %3248 = vmatpush.bf16.msra.mxu0 %v2903
  %3249 = vmatpush.bf16.msra.mxu0 %v2899
  %3250 = vmatpush.bf16.msra.mxu0 %v2895
  %3251 = vmatmul.bf16.gmra.mxu0 %v2336
  %v3252 = vpop.f32.mrf.mxu0
  %v3253 = vadd.f32 %v3239, %v3252
  %v3254 = vpop.f32.mrf.mxu0
  %v3255 = vadd.f32 %v3241, %v3254
  %3256 = vdwg.mxu0
  %3257 = vmatpush.bf16.msra.mxu0 %v2955
  %3258 = vmatpush.bf16.msra.mxu0 %v2951
  %3259 = vmatpush.bf16.msra.mxu0 %v2947
  %3260 = vmatpush.bf16.msra.mxu0 %v2943
  %3261 = vmatpush.bf16.msra.mxu0 %v2939
  %3262 = vmatpush.bf16.msra.mxu0 %v2935
  %3263 = vmatpush.bf16.msra.mxu0 %v2931
  %3264 = vmatpush.bf16.msra.mxu0 %v2927
  %3265 = vmatmul.bf16.gmra.mxu0 %v2337
  %v3266 = vpop.f32.mrf.mxu0
  %v3267 = vadd.f32 %v3253, %v3266
  %v3268 = vpop.f32.mrf.mxu0
  %v3269 = vadd.f32 %v3255, %v3268
  %3270 = vdwg.mxu0
  %3271 = vmatpush.bf16.msra.mxu0 %v2987
  %3272 = vmatpush.bf16.msra.mxu0 %v2983
  %3273 = vmatpush.bf16.msra.mxu0 %v2979
  %3274 = vmatpush.bf16.msra.mxu0 %v2975
  %3275 = vmatpush.bf16.msra.mxu0 %v2971
  %3276 = vmatpush.bf16.msra.mxu0 %v2967
  %3277 = vmatpush.bf16.msra.mxu0 %v2963
  %3278 = vmatpush.bf16.msra.mxu0 %v2959
  %3279 = vmatmul.bf16.gmra.mxu0 %v2338
  %v3280 = vpop.f32.mrf.mxu0
  %v3281 = vadd.f32 %v3267, %v3280
  %v3282 = vpop.f32.mrf.mxu0
  %v3283 = vadd.f32 %v3269, %v3282
  %3284 = vdwg.mxu0
  %3285 = vmatpush.bf16.msra.mxu0 %v2892
  %3286 = vmatpush.bf16.msra.mxu0 %v2888
  %3287 = vmatpush.bf16.msra.mxu0 %v2884
  %3288 = vmatpush.bf16.msra.mxu0 %v2880
  %3289 = vmatpush.bf16.msra.mxu0 %v2876
  %3290 = vmatpush.bf16.msra.mxu0 %v2872
  %3291 = vmatpush.bf16.msra.mxu0 %v2868
  %3292 = vmatpush.bf16.msra.mxu0 %v2864
  %3293 = vmatmul.bf16.gmra.mxu0 %v2335
  %v3294 = vpop.f32.mrf.mxu0
  %v3295 = vadd.f32 %v2472, %v3294
  %v3296 = vpop.f32.mrf.mxu0
  %v3297 = vadd.f32 %v2472, %v3296
  %3298 = vdwg.mxu0
  %3299 = vmatpush.bf16.msra.mxu0 %v2924
  %3300 = vmatpush.bf16.msra.mxu0 %v2920
  %3301 = vmatpush.bf16.msra.mxu0 %v2916
  %3302 = vmatpush.bf16.msra.mxu0 %v2912
  %3303 = vmatpush.bf16.msra.mxu0 %v2908
  %3304 = vmatpush.bf16.msra.mxu0 %v2904
  %3305 = vmatpush.bf16.msra.mxu0 %v2900
  %3306 = vmatpush.bf16.msra.mxu0 %v2896
  %3307 = vmatmul.bf16.gmra.mxu0 %v2336
  %v3308 = vpop.f32.mrf.mxu0
  %v3309 = vadd.f32 %v3295, %v3308
  %v3310 = vpop.f32.mrf.mxu0
  %v3311 = vadd.f32 %v3297, %v3310
  %3312 = vdwg.mxu0
  %3313 = vmatpush.bf16.msra.mxu0 %v2956
  %3314 = vmatpush.bf16.msra.mxu0 %v2952
  %3315 = vmatpush.bf16.msra.mxu0 %v2948
  %3316 = vmatpush.bf16.msra.mxu0 %v2944
  %3317 = vmatpush.bf16.msra.mxu0 %v2940
  %3318 = vmatpush.bf16.msra.mxu0 %v2936
  %3319 = vmatpush.bf16.msra.mxu0 %v2932
  %3320 = vmatpush.bf16.msra.mxu0 %v2928
  %3321 = vmatmul.bf16.gmra.mxu0 %v2337
  %v3322 = vpop.f32.mrf.mxu0
  %v3323 = vadd.f32 %v3309, %v3322
  %v3324 = vpop.f32.mrf.mxu0
  %v3325 = vadd.f32 %v3311, %v3324
  %3326 = vdwg.mxu0
  %3327 = vmatpush.bf16.msra.mxu0 %v2988
  %3328 = vmatpush.bf16.msra.mxu0 %v2984
  %3329 = vmatpush.bf16.msra.mxu0 %v2980
  %3330 = vmatpush.bf16.msra.mxu0 %v2976
  %3331 = vmatpush.bf16.msra.mxu0 %v2972
  %3332 = vmatpush.bf16.msra.mxu0 %v2968
  %3333 = vmatpush.bf16.msra.mxu0 %v2964
  %3334 = vmatpush.bf16.msra.mxu0 %v2960
  %3335 = vmatmul.bf16.gmra.mxu0 %v2338
  %v3336 = vpop.f32.mrf.mxu0
  %v3337 = vadd.f32 %v3323, %v3336
  %v3338 = vpop.f32.mrf.mxu0
  %v3339 = vadd.f32 %v3325, %v3338
  %3340 = vdwg.mxu0
  %v3341 = vmax.f32 %v3169, 0.0
  %v3342 = vmax.f32 %v3225, 0.0
  %v3343 = vmax.f32 %v3281, 0.0
  %v3344 = vmax.f32 %v3337, 0.0
  %v3345 = vmax.f32 %v3171, 0.0
  %v3346 = vmax.f32 %v3227, 0.0
  %v3347 = vmax.f32 %v3283, 0.0
  %v3348 = vmax.f32 %v3339, 0.0
  %v3349 = vpack.c.bf16 %v3345, %v3341
  %v3350 = vpack.c.bf16 %v3346, %v3342
  %v3351 = vpack.c.bf16 %v3347, %v3343
  %v3352 = vpack.c.bf16 %v3348, %v3344
  %v3353 = vld [vmem:[%s9] sm:$0xf]
  %v3354 = vld [vmem:[%s9 + $0x4] sm:$0xf]
  %v3355 = vld [vmem:[%s9 + $0x8] sm:$0xf]
  %v3356 = vld [vmem:[%s9 + $0xc] sm:$0xf]
  %v3357 = vld [vmem:[%s9 + $0x10] sm:$0xf]
  %v3358 = vld [vmem:[%s9 + $0x14] sm:$0xf]
  %v3359 = vld [vmem:[%s9 + $0x18] sm:$0xf]
  %v3360 = vld [vmem:[%s9 + $0x1c] sm:$0xf]
  %v3361 = vld [vmem:[%s9 + $0x20] sm:$0xf]
  %v3362 = vld [vmem:[%s9 + $0x24] sm:$0xf]
  %v3363 = vld [vmem:[%s9 + $0x28] sm:$0xf]
  %v3364 = vld [vmem:[%s9 + $0x2c] sm:$0xf]
  %v3365 = vld [vmem:[%s9 + $0x30] sm:$0xf]
  %v3366 = vld [vmem:[%s9 + $0x34] sm:$0xf]
  %v3367 = vld [vmem:[%s9 + $0x38] sm:$0xf]
  %v3368 = vld [vmem:[%s9 + $0x3c] sm:$0xf]
  %v3369 = vld [vmem:[%s9 + $0x40] sm:$0xf]
  %v3370 = vld [vmem:[%s9 + $0x44] sm:$0xf]
  %v3371 = vld [vmem:[%s9 + $0x48] sm:$0xf]
  %v3372 = vld [vmem:[%s9 + $0x4c] sm:$0xf]
  %v3373 = vld [vmem:[%s9 + $0x50] sm:$0xf]
  %v3374 = vld [vmem:[%s9 + $0x54] sm:$0xf]
  %v3375 = vld [vmem:[%s9 + $0x58] sm:$0xf]
  %v3376 = vld [vmem:[%s9 + $0x5c] sm:$0xf]
  %v3377 = vld [vmem:[%s9 + $0x60] sm:$0xf]
  %v3378 = vld [vmem:[%s9 + $0x64] sm:$0xf]
  %v3379 = vld [vmem:[%s9 + $0x68] sm:$0xf]
  %v3380 = vld [vmem:[%s9 + $0x6c] sm:$0xf]
  %v3381 = vld [vmem:[%s9 + $0x70] sm:$0xf]
  %v3382 = vld [vmem:[%s9 + $0x74] sm:$0xf]
  %v3383 = vld [vmem:[%s9 + $0x78] sm:$0xf]
  %v3384 = vld [vmem:[%s9 + $0x7c] sm:$0xf]
  %v3385 = vld [vmem:[%s9 + $0x80] sm:$0xf]
  %v3386 = vld [vmem:[%s9 + $0x84] sm:$0xf]
  %v3387 = vld [vmem:[%s9 + $0x88] sm:$0xf]
  %v3388 = vld [vmem:[%s9 + $0x8c] sm:$0xf]
  %v3389 = vld [vmem:[%s9 + $0x90] sm:$0xf]
  %v3390 = vld [vmem:[%s9 + $0x94] sm:$0xf]
  %v3391 = vld [vmem:[%s9 + $0x98] sm:$0xf]
  %v3392 = vld [vmem:[%s9 + $0x9c] sm:$0xf]
  %v3393 = vld [vmem:[%s9 + $0xa0] sm:$0xf]
  %v3394 = vld [vmem:[%s9 + $0xa4] sm:$0xf]
  %v3395 = vld [vmem:[%s9 + $0xa8] sm:$0xf]
  %v3396 = vld [vmem:[%s9 + $0xac] sm:$0xf]
  %v3397 = vld [vmem:[%s9 + $0xb0] sm:$0xf]
  %v3398 = vld [vmem:[%s9 + $0xb4] sm:$0xf]
  %v3399 = vld [vmem:[%s9 + $0xb8] sm:$0xf]
  %v3400 = vld [vmem:[%s9 + $0xbc] sm:$0xf]
  %v3401 = vld [vmem:[%s9 + $0xc0] sm:$0xf]
  %v3402 = vld [vmem:[%s9 + $0xc4] sm:$0xf]
  %v3403 = vld [vmem:[%s9 + $0xc8] sm:$0xf]
  %v3404 = vld [vmem:[%s9 + $0xcc] sm:$0xf]
  %v3405 = vld [vmem:[%s9 + $0xd0] sm:$0xf]
  %v3406 = vld [vmem:[%s9 + $0xd4] sm:$0xf]
  %v3407 = vld [vmem:[%s9 + $0xd8] sm:$0xf]
  %v3408 = vld [vmem:[%s9 + $0xdc] sm:$0xf]
  %v3409 = vld [vmem:[%s9 + $0xe0] sm:$0xf]
  %v3410 = vld [vmem:[%s9 + $0xe4] sm:$0xf]
  %v3411 = vld [vmem:[%s9 + $0xe8] sm:$0xf]
  %v3412 = vld [vmem:[%s9 + $0xec] sm:$0xf]
  %v3413 = vld [vmem:[%s9 + $0xf0] sm:$0xf]
  %v3414 = vld [vmem:[%s9 + $0xf4] sm:$0xf]
  %v3415 = vld [vmem:[%s9 + $0xf8] sm:$0xf]
  %v3416 = vld [vmem:[%s9 + $0xfc] sm:$0xf]
  %v3417 = vld [vmem:[%s10] sm:$0x1]
  %v3419 = vperm.slane %v3417, 0
  %v3485 = vunpack.c.l.b16 %v3353
  %v3486 = vunpack.c.l.b16 %v3354
  %v3487 = vunpack.c.l.b16 %v3355
  %v3488 = vunpack.c.l.b16 %v3356
  %v3489 = vunpack.c.l.b16 %v3357
  %v3490 = vunpack.c.l.b16 %v3358
  %v3491 = vunpack.c.l.b16 %v3359
  %v3492 = vunpack.c.l.b16 %v3360
  %v3493 = vunpack.c.l.b16 %v3361
  %v3494 = vunpack.c.l.b16 %v3362
  %v3495 = vunpack.c.l.b16 %v3363
  %v3496 = vunpack.c.l.b16 %v3364
  %v3497 = vunpack.c.l.b16 %v3365
  %v3498 = vunpack.c.l.b16 %v3366
  %v3499 = vunpack.c.l.b16 %v3367
  %v3500 = vunpack.c.l.b16 %v3368
  %v3501 = vunpack.c.l.b16 %v3369
  %v3502 = vunpack.c.l.b16 %v3370
  %v3503 = vunpack.c.l.b16 %v3371
  %v3504 = vunpack.c.l.b16 %v3372
  %v3505 = vunpack.c.l.b16 %v3373
  %v3506 = vunpack.c.l.b16 %v3374
  %v3507 = vunpack.c.l.b16 %v3375
  %v3508 = vunpack.c.l.b16 %v3376
  %v3509 = vunpack.c.l.b16 %v3377
  %v3510 = vunpack.c.l.b16 %v3378
  %v3511 = vunpack.c.l.b16 %v3379
  %v3512 = vunpack.c.l.b16 %v3380
  %v3513 = vunpack.c.l.b16 %v3381
  %v3514 = vunpack.c.l.b16 %v3382
  %v3515 = vunpack.c.l.b16 %v3383
  %v3516 = vunpack.c.l.b16 %v3384
  %v3517 = vunpack.c.l.b16 %v3385
  %v3518 = vunpack.c.l.b16 %v3386
  %v3519 = vunpack.c.l.b16 %v3387
  %v3520 = vunpack.c.l.b16 %v3388
  %v3521 = vunpack.c.l.b16 %v3389
  %v3522 = vunpack.c.l.b16 %v3390
  %v3523 = vunpack.c.l.b16 %v3391
  %v3524 = vunpack.c.l.b16 %v3392
  %v3525 = vunpack.c.l.b16 %v3393
  %v3526 = vunpack.c.l.b16 %v3394
  %v3527 = vunpack.c.l.b16 %v3395
  %v3528 = vunpack.c.l.b16 %v3396
  %v3529 = vunpack.c.l.b16 %v3397
  %v3530 = vunpack.c.l.b16 %v3398
  %v3531 = vunpack.c.l.b16 %v3399
  %v3532 = vunpack.c.l.b16 %v3400
  %v3533 = vunpack.c.l.b16 %v3401
  %v3534 = vunpack.c.l.b16 %v3402
  %v3535 = vunpack.c.l.b16 %v3403
  %v3536 = vunpack.c.l.b16 %v3404
  %v3537 = vunpack.c.l.b16 %v3405
  %v3538 = vunpack.c.l.b16 %v3406
  %v3539 = vunpack.c.l.b16 %v3407
  %v3540 = vunpack.c.l.b16 %v3408
  %v3541 = vunpack.c.l.b16 %v3409
  %v3542 = vunpack.c.l.b16 %v3410
  %v3543 = vunpack.c.l.b16 %v3411
  %v3544 = vunpack.c.l.b16 %v3412
  %v3545 = vunpack.c.l.b16 %v3413
  %v3546 = vunpack.c.l.b16 %v3414
  %v3547 = vunpack.c.l.b16 %v3415
  %v3548 = vunpack.c.l.b16 %v3416
  %v3549 = vpack.c.b16 %v3486, %v3485
  %v3550 = vpack.c.b16 %v3488, %v3487
  %v3551 = vpack.c.b16 %v3490, %v3489
  %v3552 = vpack.c.b16 %v3492, %v3491
  %v3553 = vpack.c.b16 %v3494, %v3493
  %v3554 = vpack.c.b16 %v3496, %v3495
  %v3555 = vpack.c.b16 %v3498, %v3497
  %v3556 = vpack.c.b16 %v3500, %v3499
  %v3557 = vpack.c.b16 %v3502, %v3501
  %v3558 = vpack.c.b16 %v3504, %v3503
  %v3559 = vpack.c.b16 %v3506, %v3505
  %v3560 = vpack.c.b16 %v3508, %v3507
  %v3561 = vpack.c.b16 %v3510, %v3509
  %v3562 = vpack.c.b16 %v3512, %v3511
  %v3563 = vpack.c.b16 %v3514, %v3513
  %v3564 = vpack.c.b16 %v3516, %v3515
  %v3565 = vpack.c.b16 %v3518, %v3517
  %v3566 = vpack.c.b16 %v3520, %v3519
  %v3567 = vpack.c.b16 %v3522, %v3521
  %v3568 = vpack.c.b16 %v3524, %v3523
  %v3569 = vpack.c.b16 %v3526, %v3525
  %v3570 = vpack.c.b16 %v3528, %v3527
  %v3571 = vpack.c.b16 %v3530, %v3529
  %v3572 = vpack.c.b16 %v3532, %v3531
  %v3573 = vpack.c.b16 %v3534, %v3533
  %v3574 = vpack.c.b16 %v3536, %v3535
  %v3575 = vpack.c.b16 %v3538, %v3537
  %v3576 = vpack.c.b16 %v3540, %v3539
  %v3577 = vpack.c.b16 %v3542, %v3541
  %v3578 = vpack.c.b16 %v3544, %v3543
  %v3579 = vpack.c.b16 %v3546, %v3545
  %v3580 = vpack.c.b16 %v3548, %v3547
  %3613 = vmatpush.bf16.msra.mxu0 %v3556
  %3614 = vmatpush.bf16.msra.mxu0 %v3555
  %3615 = vmatpush.bf16.msra.mxu0 %v3554
  %3616 = vmatpush.bf16.msra.mxu0 %v3553
  %3617 = vmatpush.bf16.msra.mxu0 %v3552
  %3618 = vmatpush.bf16.msra.mxu0 %v3551
  %3619 = vmatpush.bf16.msra.mxu0 %v3550
  %3620 = vmatpush.bf16.msra.mxu0 %v3549
  %3621 = vmatmul.bf16.gmra.mxu0 %v3349
  %v3622 = vpop.f32.mrf.mxu0
  %v3623 = vadd.f32 %v3419, %v3622
  %v3624 = vpop.f32.mrf.mxu0
  %v3625 = vadd.f32 %v3419, %v3624
  %3626 = vdwg.mxu0
  %3627 = vmatpush.bf16.msra.mxu0 %v3564
  %3628 = vmatpush.bf16.msra.mxu0 %v3563
  %3629 = vmatpush.bf16.msra.mxu0 %v3562
  %3630 = vmatpush.bf16.msra.mxu0 %v3561
  %3631 = vmatpush.bf16.msra.mxu0 %v3560
  %3632 = vmatpush.bf16.msra.mxu0 %v3559
  %3633 = vmatpush.bf16.msra.mxu0 %v3558
  %3634 = vmatpush.bf16.msra.mxu0 %v3557
  %3635 = vmatmul.bf16.gmra.mxu0 %v3350
  %v3636 = vpop.f32.mrf.mxu0
  %v3637 = vadd.f32 %v3623, %v3636
  %v3638 = vpop.f32.mrf.mxu0
  %v3639 = vadd.f32 %v3625, %v3638
  %3640 = vdwg.mxu0
  %3641 = vmatpush.bf16.msra.mxu0 %v3572
  %3642 = vmatpush.bf16.msra.mxu0 %v3571
  %3643 = vmatpush.bf16.msra.mxu0 %v3570
  %3644 = vmatpush.bf16.msra.mxu0 %v3569
  %3645 = vmatpush.bf16.msra.mxu0 %v3568
  %3646 = vmatpush.bf16.msra.mxu0 %v3567
  %3647 = vmatpush.bf16.msra.mxu0 %v3566
  %3648 = vmatpush.bf16.msra.mxu0 %v3565
  %3649 = vmatmul.bf16.gmra.mxu0 %v3351
  %v3650 = vpop.f32.mrf.mxu0
  %v3651 = vadd.f32 %v3637, %v3650
  %v3652 = vpop.f32.mrf.mxu0
  %v3653 = vadd.f32 %v3639, %v3652
  %3654 = vdwg.mxu0
  %3655 = vmatpush.bf16.msra.mxu0 %v3580
  %3656 = vmatpush.bf16.msra.mxu0 %v3579
  %3657 = vmatpush.bf16.msra.mxu0 %v3578
  %3658 = vmatpush.bf16.msra.mxu0 %v3577
  %3659 = vmatpush.bf16.msra.mxu0 %v3576
  %3660 = vmatpush.bf16.msra.mxu0 %v3575
  %3661 = vmatpush.bf16.msra.mxu0 %v3574
  %3662 = vmatpush.bf16.msra.mxu0 %v3573
  %3663 = vmatmul.bf16.gmra.mxu0 %v3352
  %v3664 = vpop.f32.mrf.mxu0
  %v3665 = vadd.f32 %v3651, %v3664
  %v3666 = vpop.f32.mrf.mxu0
  %v3667 = vadd.f32 %v3653, %v3666
  %3668 = vdwg.mxu0
  %3669 = vst [vmem:[%s11] sm:$0xff] %v3665
  %3670 = vst [vmem:[%s11 + $0x8] sm:$0xff] %v3667
  // Predicated region
  $region46: #{wae_discriminator_forward.1} parent=0 // pred_check
    _
  $region47: #{wae_discriminator_forward.1} parent=0 // pred_check_branch
    %3672 = sbr.rel (0) target = $region49
  $region48: #{wae_discriminator_forward.1} parent=0 // pred_region
    _
  $region49: #{wae_discriminator_forward.1} parent=0 // pred_fallthru
    _
  // Predicated region
  $region50: #{wae_discriminator_forward.1} parent=0 // pred_check
    _
  $region51: #{wae_discriminator_forward.1} parent=0 // pred_check_branch
    %3674 = sbr.rel (0) target = $region53
  $region52: #{wae_discriminator_forward.1} parent=0 // pred_region
    _
  $region53: #{wae_discriminator_forward.1} parent=0 // pred_fallthru
    _

</llo_original>
